<compile_context>
chip_gen: v7x
topology: tpu7x:2x2x1
jax: 0.10.0
libtpu: 0.0.40
codegen_flags: <defaults>
</compile_context>

<pallas_src>
import jax
import jax.numpy as jnp
import numpy as np
from jax.experimental import pallas as pl
from jax.experimental.pallas import tpu as pltpu

T_HID = 768      # BERT hidden size (already lane aligned: 6*128)
I_HID = 1000     # resnet34 output size
I_PAD = 1024     # img feature dim zero-padded to a multiple of 128
D = 128          # fused dim
NCLS = 3         # output classes
N_PAD = 128      # lane-dense (padded) output width


def _round_up(x, m):
    return (x + m - 1) // m * m


def fusion_kernel(img_ref, txt_ref,
                  wi_ref, bi_ref,      # i_linear: [1024,128] bf16, [1,128] f32
                  wt_ref, bt_ref,      # t_linear: [768,128]  bf16, [1,128] f32
                  wiq_ref, wtq_ref,    # img_q / txt_q weights as [1,128] f32
                  wfc_ref, bfc_ref,    # fc (padded): [128,128] f32, [1,128] f32
                  biq_ref, btq_ref,    # img_q / txt_q biases: [1,1] f32 in SMEM
                  out_ref):            # [TB, 128] f32 (only first 3 lanes valid)
    img = img_ref[...]                                   # [TB, 1024] bf16
    txt = txt_ref[...]                                   # [TB, 768]  bf16

    # img branch: i_linear + relu  (bf16 operands, f32 MXU accumulation)
    img_out = jnp.dot(img, wi_ref[...],
                      preferred_element_type=jnp.float32) + bi_ref[...]
    img_out = jnp.maximum(img_out, 0.0)                  # [TB, 128] f32
    # img_q: 128 -> 1 as a lane reduction; scalar bias read from SMEM
    img_w = (jnp.sum(img_out * wiq_ref[...], axis=-1, keepdims=True)
             + biq_ref[0, 0])                            # [TB, 1]

    # txt branch: t_linear + relu
    txt_out = jnp.dot(txt, wt_ref[...],
                      preferred_element_type=jnp.float32) + bt_ref[...]
    txt_out = jnp.maximum(txt_out, 0.0)                  # [TB, 128] f32
    txt_w = (jnp.sum(txt_out * wtq_ref[...], axis=-1, keepdims=True)
             + btq_ref[0, 0])                            # [TB, 1]

    # weighted fusion + final fc (kept f32; output lane-dense, padded to 128)
    last = img_w * img_out + txt_w * txt_out             # [TB, 128] f32
    out_ref[...] = jnp.dot(last, wfc_ref[...],
                           preferred_element_type=jnp.float32) + bfc_ref[...]


def weight_model_head(img_feat, txt_feat, kparams, *, tb=256):
    """Fusion head. img_feat [B,1000] f32, txt_feat [B,768] f32 -> [B,3] f32."""
    B = img_feat.shape[0]
    TB = min(tb, _round_up(max(B, 1), 8))   # batch tile, multiple of 8 sublanes
    Bp = _round_up(B, TB)
    grid = (Bp // TB,)

    # Pad batch to a tile multiple, pad img features 1000 -> 1024 (lane dense),
    # cast the activations feeding the big matmuls to bf16 (halves HBM bytes).
    img = jnp.pad(img_feat, ((0, Bp - B), (0, I_PAD - I_HID))).astype(jnp.bfloat16)
    txt = jnp.pad(txt_feat, ((0, Bp - B), (0, 0))).astype(jnp.bfloat16)

    def resident(shape):    # weights: same block every tile -> stay in VMEM
        return pl.BlockSpec(shape, lambda i: (0, 0))

    smem = pl.BlockSpec(memory_space=pltpu.MemorySpace.SMEM)

    out = pl.pallas_call(
        fusion_kernel,
        out_shape=jax.ShapeDtypeStruct((Bp, N_PAD), jnp.float32),
        grid=grid,
        in_specs=[
            pl.BlockSpec((TB, I_PAD), lambda i: (i, 0)),   # img activations
            pl.BlockSpec((TB, T_HID), lambda i: (i, 0)),   # txt activations
            resident((I_PAD, D)), resident((1, D)),        # wi, bi
            resident((T_HID, D)), resident((1, D)),        # wt, bt
            resident((1, D)), resident((1, D)),            # wiq, wtq
            resident((D, N_PAD)), resident((1, N_PAD)),    # wfc, bfc (padded)
            smem, smem,                                    # biq, btq scalars
        ],
        out_specs=pl.BlockSpec((TB, N_PAD), lambda i: (i, 0)),
        compiler_params=pltpu.CompilerParams(
            dimension_semantics=("parallel",)),            # shard tiles on v7x
    )(img, txt,
      kparams["wi"], kparams["bi"],
      kparams["wt"], kparams["bt"],
      kparams["wiq"], kparams["wtq"],
      kparams["wfc"], kparams["bfc"],
      kparams["biq"], kparams["btq"])
    return out[:B, :NCLS]


def init_params(key):
    """f32 reference-layout params (weights pre-transposed to [in, out])."""
    ks = jax.random.split(key, 10)

    def lin(kw, kb, fan_in, fan_out):
        bound = 1.0 / np.sqrt(fan_in)
        w = jax.random.uniform(kw, (fan_in, fan_out), jnp.float32, -bound, bound)
        b = jax.random.uniform(kb, (1, fan_out), jnp.float32, -bound, bound)
        return w, b

    wi, bi = lin(ks[0], ks[1], I_HID, D)      # i_linear
    wt, bt = lin(ks[2], ks[3], T_HID, D)      # t_linear
    wiq, biq = lin(ks[4], ks[5], D, 1)        # img_q
    wtq, btq = lin(ks[6], ks[7], D, 1)        # txt_q
    wfc, bfc = lin(ks[8], ks[9], D, NCLS)     # fc
    return dict(wi=wi, bi=bi, wt=wt, bt=bt,
                wiq=jnp.transpose(wiq), biq=biq,     # [1,128] for lane-reduce
                wtq=jnp.transpose(wtq), btq=btq,     # [1,128]
                wfc=wfc, bfc=bfc)


def prepare_kernel_params(p):
    """One-time prep: pad wi K 1000->1024, cast big weights to bf16, pad fc to
    a lane-dense [128,128]/[1,128]; keep biases and the tiny fc in f32."""
    wi = jnp.pad(p["wi"], ((0, I_PAD - I_HID), (0, 0))).astype(jnp.bfloat16)
    wt = p["wt"].astype(jnp.bfloat16)
    wfc = jnp.pad(p["wfc"], ((0, 0), (0, N_PAD - NCLS)))
    bfc = jnp.pad(p["bfc"], ((0, 0), (0, N_PAD - NCLS)))
    return dict(wi=wi, bi=p["bi"], wt=wt, bt=p["bt"],
                wiq=p["wiq"], wtq=p["wtq"],
                biq=p["biq"], btq=p["btq"],
                wfc=wfc, bfc=bfc)


def reference_f32(img_feat, txt_feat, p):
    img_out = jnp.maximum(img_feat @ p["wi"] + p["bi"], 0.0)
    img_w = jnp.sum(img_out * p["wiq"], axis=-1, keepdims=True) + p["biq"]
    txt_out = jnp.maximum(txt_feat @ p["wt"] + p["bt"], 0.0)
    txt_w = jnp.sum(txt_out * p["wtq"], axis=-1, keepdims=True) + p["btq"]
    last = img_w * img_out + txt_w * txt_out
    return last @ p["wfc"] + p["bfc"]


def reference_bf16(img_feat, txt_feat, p):
    """Reference matching the kernel's bf16-input / f32-accumulation math."""
    img = img_feat.astype(jnp.bfloat16)
    txt = txt_feat.astype(jnp.bfloat16)
    wi = p["wi"].astype(jnp.bfloat16)
    wt = p["wt"].astype(jnp.bfloat16)
    img_out = jnp.maximum(
        jnp.dot(img, wi, preferred_element_type=jnp.float32) + p["bi"], 0.0)
    img_w = jnp.sum(img_out * p["wiq"], axis=-1, keepdims=True) + p["biq"]
    txt_out = jnp.maximum(
        jnp.dot(txt, wt, preferred_element_type=jnp.float32) + p["bt"], 0.0)
    txt_w = jnp.sum(txt_out * p["wtq"], axis=-1, keepdims=True) + p["btq"]
    last = img_w * img_out + txt_w * txt_out
    return jnp.dot(last, p["wfc"], preferred_element_type=jnp.float32) + p["bfc"]


if __name__ == "__main__":
    key = jax.random.PRNGKey(0)
    k_img, k_txt, k_params = jax.random.split(key, 3)

    B = 4
    # stand-ins for the frozen backbone outputs (see TODO(synk) above)
    img_feat = jax.random.normal(k_img, (B, I_HID), jnp.float32)   # resnet34 logits
    txt_feat = jax.random.normal(k_txt, (B, T_HID), jnp.float32)   # BERT CLS hidden

    params = init_params(k_params)
    kparams = prepare_kernel_params(params)

    out = weight_model_head(img_feat, txt_feat, kparams)
    out = jax.block_until_ready(out)
    assert out.shape == (B, NCLS)

    # tight check vs. a reference using identical bf16-input / f32-accum math
    ref16 = jax.block_until_ready(reference_bf16(img_feat, txt_feat, params))
    np.testing.assert_allclose(np.asarray(out), np.asarray(ref16),
                               rtol=1e-3, atol=1e-3)
    # loose sanity check vs. the full-f32 reference (bf16 weight cast drift)
    ref32 = jax.block_until_ready(reference_f32(img_feat, txt_feat, params))
    np.testing.assert_allclose(np.asarray(out), np.asarray(ref32),
                               rtol=3e-2, atol=3e-2)

    print("KERNEL_OK")
</pallas_src>

<mosaic_0001>
module attributes {stable_mosaic.version = 11 : i64} {
  func.func @fusion_kernel(%arg0: i32, %arg1: memref<8x1024xbf16, #tpu.memory_space<vmem>>, %arg2: memref<8x768xbf16, #tpu.memory_space<vmem>>, %arg3: memref<1024x128xbf16, #tpu.memory_space<vmem>>, %arg4: memref<1x128xf32, #tpu.memory_space<vmem>>, %arg5: memref<768x128xbf16, #tpu.memory_space<vmem>>, %arg6: memref<1x128xf32, #tpu.memory_space<vmem>>, %arg7: memref<1x128xf32, #tpu.memory_space<vmem>>, %arg8: memref<1x128xf32, #tpu.memory_space<vmem>>, %arg9: memref<128x128xf32, #tpu.memory_space<vmem>>, %arg10: memref<1x128xf32, #tpu.memory_space<vmem>>, %arg11: memref<1x1xf32, #tpu.memory_space<smem>>, %arg12: memref<1x1xf32, #tpu.memory_space<smem>>, %arg13: memref<8x128xf32, #tpu.memory_space<vmem>>) attributes {dimension_semantics = [#tpu.dimension_semantics<parallel>], iteration_bounds = array<i64: 1>, scalar_prefetch = 0 : i64, scratch_operands = 0 : i64, tpu.core_type = #tpu.core_type<tc>, window_params = [{transform_indices = @transform_0, window_bounds = array<i64: 8, 1024>}, {transform_indices = @transform_1, window_bounds = array<i64: 8, 768>}, {pipeline_mode = #tpu.pipeline_mode<synchronous>, transform_indices = @transform_2, window_bounds = array<i64: 1024, 128>}, {pipeline_mode = #tpu.pipeline_mode<synchronous>, transform_indices = @transform_3, window_bounds = array<i64: 1, 128>}, {pipeline_mode = #tpu.pipeline_mode<synchronous>, transform_indices = @transform_4, window_bounds = array<i64: 768, 128>}, {pipeline_mode = #tpu.pipeline_mode<synchronous>, transform_indices = @transform_5, window_bounds = array<i64: 1, 128>}, {pipeline_mode = #tpu.pipeline_mode<synchronous>, transform_indices = @transform_6, window_bounds = array<i64: 1, 128>}, {pipeline_mode = #tpu.pipeline_mode<synchronous>, transform_indices = @transform_7, window_bounds = array<i64: 1, 128>}, {pipeline_mode = #tpu.pipeline_mode<synchronous>, transform_indices = @transform_8, window_bounds = array<i64: 128, 128>}, {pipeline_mode = #tpu.pipeline_mode<synchronous>, transform_indices = @transform_9, window_bounds = array<i64: 1, 128>}, {transform_indices = @transform_10, window_bounds = array<i64: 1, 1>}, {transform_indices = @transform_11, window_bounds = array<i64: 1, 1>}, {transform_indices = @transform_12, window_bounds = array<i64: 8, 128>}]} {
    %c0 = arith.constant 0 : index
    %c0_0 = arith.constant 0 : index
    %0 = vector.load %arg1[%c0, %c0_0] : memref<8x1024xbf16, #tpu.memory_space<vmem>>, vector<8x1024xbf16>
    %c0_1 = arith.constant 0 : index
    %c0_2 = arith.constant 0 : index
    %1 = vector.load %arg2[%c0_1, %c0_2] : memref<8x768xbf16, #tpu.memory_space<vmem>>, vector<8x768xbf16>
    %c0_3 = arith.constant 0 : index
    %c0_4 = arith.constant 0 : index
    %2 = vector.load %arg3[%c0_3, %c0_4] : memref<1024x128xbf16, #tpu.memory_space<vmem>>, vector<1024x128xbf16>
    %cst = arith.constant dense<0.000000e+00> : vector<8x128xf32>
    %3 = tpu.matmul %0, %2, %cst {dimension_numbers = #tpu.dot_dimension_numbers<[1], [0], [0], [1], [0, 0, 1, 1], [], []>} : vector<8x1024xbf16>, vector<1024x128xbf16>, vector<8x128xf32> -> vector<8x128xf32>
    %c0_5 = arith.constant 0 : index
    %c0_6 = arith.constant 0 : index
    %4 = vector.load %arg4[%c0_5, %c0_6] : memref<1x128xf32, #tpu.memory_space<vmem>>, vector<1x128xf32>
    %5 = vector.broadcast %4 : vector<1x128xf32> to vector<8x128xf32>
    %6 = arith.addf %3, %5 : vector<8x128xf32>
    %cst_7 = arith.constant 0.000000e+00 : f32
    %7 = vector.broadcast %cst_7 : f32 to vector<8x128xf32>
    %8 = arith.maximumf %6, %7 : vector<8x128xf32>
    %c0_8 = arith.constant 0 : index
    %c0_9 = arith.constant 0 : index
    %9 = vector.load %arg7[%c0_8, %c0_9] : memref<1x128xf32, #tpu.memory_space<vmem>>, vector<1x128xf32>
    %10 = vector.broadcast %9 : vector<1x128xf32> to vector<8x128xf32>
    %11 = arith.mulf %8, %10 : vector<8x128xf32>
    %cst_10 = arith.constant dense<0.000000e+00> : vector<8xf32>
    %12 = vector.multi_reduction <add>, %11, %cst_10 [1] : vector<8x128xf32> to vector<8xf32>
    %13 = vector.shape_cast %12 : vector<8xf32> to vector<8x1xf32>
    %c0_11 = arith.constant 0 : index
    %c0_12 = arith.constant 0 : index
    %14 = memref.load %arg11[%c0_11, %c0_12] : memref<1x1xf32, #tpu.memory_space<smem>>
    %15 = vector.broadcast %14 : f32 to vector<8x1xf32>
    %16 = arith.addf %13, %15 : vector<8x1xf32>
    %c0_13 = arith.constant 0 : index
    %c0_14 = arith.constant 0 : index
    %17 = vector.load %arg5[%c0_13, %c0_14] : memref<768x128xbf16, #tpu.memory_space<vmem>>, vector<768x128xbf16>
    %cst_15 = arith.constant dense<0.000000e+00> : vector<8x128xf32>
    %18 = tpu.matmul %1, %17, %cst_15 {dimension_numbers = #tpu.dot_dimension_numbers<[1], [0], [0], [1], [0, 0, 1, 1], [], []>} : vector<8x768xbf16>, vector<768x128xbf16>, vector<8x128xf32> -> vector<8x128xf32>
    %c0_16 = arith.constant 0 : index
    %c0_17 = arith.constant 0 : index
    %19 = vector.load %arg6[%c0_16, %c0_17] : memref<1x128xf32, #tpu.memory_space<vmem>>, vector<1x128xf32>
    %20 = vector.broadcast %19 : vector<1x128xf32> to vector<8x128xf32>
    %21 = arith.addf %18, %20 : vector<8x128xf32>
    %cst_18 = arith.constant 0.000000e+00 : f32
    %22 = vector.broadcast %cst_18 : f32 to vector<8x128xf32>
    %23 = arith.maximumf %21, %22 : vector<8x128xf32>
    %c0_19 = arith.constant 0 : index
    %c0_20 = arith.constant 0 : index
    %24 = vector.load %arg8[%c0_19, %c0_20] : memref<1x128xf32, #tpu.memory_space<vmem>>, vector<1x128xf32>
    %25 = vector.broadcast %24 : vector<1x128xf32> to vector<8x128xf32>
    %26 = arith.mulf %23, %25 : vector<8x128xf32>
    %cst_21 = arith.constant dense<0.000000e+00> : vector<8xf32>
    %27 = vector.multi_reduction <add>, %26, %cst_21 [1] : vector<8x128xf32> to vector<8xf32>
    %28 = vector.shape_cast %27 : vector<8xf32> to vector<8x1xf32>
    %c0_22 = arith.constant 0 : index
    %c0_23 = arith.constant 0 : index
    %29 = memref.load %arg12[%c0_22, %c0_23] : memref<1x1xf32, #tpu.memory_space<smem>>
    %30 = vector.broadcast %29 : f32 to vector<8x1xf32>
    %31 = arith.addf %28, %30 : vector<8x1xf32>
    %32 = vector.broadcast %16 : vector<8x1xf32> to vector<8x128xf32>
    %33 = arith.mulf %32, %8 : vector<8x128xf32>
    %34 = vector.broadcast %31 : vector<8x1xf32> to vector<8x128xf32>
    %35 = arith.mulf %34, %23 : vector<8x128xf32>
    %36 = arith.addf %33, %35 : vector<8x128xf32>
    %c0_24 = arith.constant 0 : index
    %c0_25 = arith.constant 0 : index
    %37 = vector.load %arg9[%c0_24, %c0_25] : memref<128x128xf32, #tpu.memory_space<vmem>>, vector<128x128xf32>
    %cst_26 = arith.constant dense<0.000000e+00> : vector<8x128xf32>
    %38 = tpu.matmul %36, %37, %cst_26 {dimension_numbers = #tpu.dot_dimension_numbers<[1], [0], [0], [1], [0, 0, 1, 1], [], []>} : vector<8x128xf32>, vector<128x128xf32>, vector<8x128xf32> -> vector<8x128xf32>
    %c0_27 = arith.constant 0 : index
    %c0_28 = arith.constant 0 : index
    %39 = vector.load %arg10[%c0_27, %c0_28] : memref<1x128xf32, #tpu.memory_space<vmem>>, vector<1x128xf32>
    %40 = vector.broadcast %39 : vector<1x128xf32> to vector<8x128xf32>
    %41 = arith.addf %38, %40 : vector<8x128xf32>
    %c0_29 = arith.constant 0 : index
    %c0_30 = arith.constant 0 : index
    %42 = vector.load %arg13[%c0_29, %c0_30] : memref<8x128xf32, #tpu.memory_space<vmem>>, vector<8x128xf32>
    tpu.vector_store %arg13[%c0_29, %c0_30], %41 {strides = array<i32>} : memref<8x128xf32, #tpu.memory_space<vmem>>, vector<8x128xf32>,
    return
  }
  func.func @transform_0(%arg0: i32) -> (i32, i32) {
    %c0_i32 = arith.constant 0 : i32
    %c0_i32_0 = arith.constant 0 : i32
    return %arg0, %c0_i32 : i32, i32
  }
  func.func @transform_1(%arg0: i32) -> (i32, i32) {
    %c0_i32 = arith.constant 0 : i32
    %c0_i32_0 = arith.constant 0 : i32
    return %arg0, %c0_i32 : i32, i32
  }
  func.func @transform_2(%arg0: i32) -> (i32, i32) {
    %c0_i32 = arith.constant 0 : i32
    %c0_i32_0 = arith.constant 0 : i32
    %c0_i32_1 = arith.constant 0 : i32
    return %c0_i32, %c0_i32_0 : i32, i32
  }
  func.func @transform_3(%arg0: i32) -> (i32, i32) {
    %c0_i32 = arith.constant 0 : i32
    %c0_i32_0 = arith.constant 0 : i32
    %c0_i32_1 = arith.constant 0 : i32
    return %c0_i32, %c0_i32_0 : i32, i32
  }
  func.func @transform_4(%arg0: i32) -> (i32, i32) {
    %c0_i32 = arith.constant 0 : i32
    %c0_i32_0 = arith.constant 0 : i32
    %c0_i32_1 = arith.constant 0 : i32
    return %c0_i32, %c0_i32_0 : i32, i32
  }
  func.func @transform_5(%arg0: i32) -> (i32, i32) {
    %c0_i32 = arith.constant 0 : i32
    %c0_i32_0 = arith.constant 0 : i32
    %c0_i32_1 = arith.constant 0 : i32
    return %c0_i32, %c0_i32_0 : i32, i32
  }
  func.func @transform_6(%arg0: i32) -> (i32, i32) {
    %c0_i32 = arith.constant 0 : i32
    %c0_i32_0 = arith.constant 0 : i32
    %c0_i32_1 = arith.constant 0 : i32
    return %c0_i32, %c0_i32_0 : i32, i32
  }
  func.func @transform_7(%arg0: i32) -> (i32, i32) {
    %c0_i32 = arith.constant 0 : i32
    %c0_i32_0 = arith.constant 0 : i32
    %c0_i32_1 = arith.constant 0 : i32
    return %c0_i32, %c0_i32_0 : i32, i32
  }
  func.func @transform_8(%arg0: i32) -> (i32, i32) {
    %c0_i32 = arith.constant 0 : i32
    %c0_i32_0 = arith.constant 0 : i32
    %c0_i32_1 = arith.constant 0 : i32
    return %c0_i32, %c0_i32_0 : i32, i32
  }
  func.func @transform_9(%arg0: i32) -> (i32, i32) {
    %c0_i32 = arith.constant 0 : i32
    %c0_i32_0 = arith.constant 0 : i32
    %c0_i32_1 = arith.constant 0 : i32
    return %c0_i32, %c0_i32_0 : i32, i32
  }
  func.func @transform_10(%arg0: i32) -> (i32, i32) {
    %c0_i32 = arith.constant 0 : i32
    %c0_i32_0 = arith.constant 0 : i32
    %c0_i32_1 = arith.constant 0 : i32
    return %c0_i32, %c0_i32_0 : i32, i32
  }
  func.func @transform_11(%arg0: i32) -> (i32, i32) {
    %c0_i32 = arith.constant 0 : i32
    %c0_i32_0 = arith.constant 0 : i32
    %c0_i32_1 = arith.constant 0 : i32
    return %c0_i32, %c0_i32_0 : i32, i32
  }
  func.func @transform_12(%arg0: i32) -> (i32, i32) {
    %c0_i32 = arith.constant 0 : i32
    %c0_i32_0 = arith.constant 0 : i32
    return %arg0, %c0_i32 : i32, i32
  }
}

</mosaic_0001>

<llo_original>
// kernel: tpu_custom_call.1
$region0: #{tpu_custom_call.1}
  #allocation0 [shape = 'u32[]', space=smem, size = 0x4, offset = 0x4, fixed_abs, tag = 'smem constant byte address 0x4 - core index']
  #allocation1 [shape = 'u32[144,128]{1,0:T(1,128)}', space=vmem, size = 0x12000, scoped, tag = 'internal scratch']
  #allocation2 [shape = 'f32[1,1]{1,0:T(1,128)S(6)}', space=smem, size = 0x200, scoped, tag = 'scoped memory for tpu_custom_call.1']
  #allocation3 [shape = 'f32[1,1]{1,0:T(1,128)S(6)}', space=smem, size = 0x200, scoped, tag = 'scoped memory for tpu_custom_call.1']
  %s0 = inlined_call_operand.hbm [shape: bf16[8,1024], index: 0, kind: input, shape index: {}]
  %s1 = inlined_call_operand.hbm [shape: bf16[8,768], index: 1, kind: input, shape index: {}]
  %s2 = inlined_call_operand.hbm [shape: bf16[1024,128], index: 2, kind: input, shape index: {}]
  %s3 = inlined_call_operand.vmem [shape: f32[1,128], index: 3, kind: input, shape index: {}]
  %s4 = inlined_call_operand.hbm [shape: bf16[768,128], index: 4, kind: input, shape index: {}]
  %s5 = inlined_call_operand.vmem [shape: f32[1,128], index: 5, kind: input, shape index: {}]
  %s6 = inlined_call_operand.vmem [shape: f32[1,128], index: 6, kind: input, shape index: {}]
  %s7 = inlined_call_operand.vmem [shape: f32[1,128], index: 7, kind: input, shape index: {}]
  %s8 = inlined_call_operand.hbm [shape: f32[128,128], index: 8, kind: input, shape index: {}]
  %s9 = inlined_call_operand.vmem [shape: f32[1,128], index: 9, kind: input, shape index: {}]
  %s10 = inlined_call_operand.<no memory space> [shape: f32[1,1], index: 10, kind: input, shape index: {}]
  %s11 = inlined_call_operand.<no memory space> [shape: f32[1,1], index: 11, kind: input, shape index: {}]
  %s12 = inlined_call_operand.hbm [shape: f32[8,128], index: 12, kind: output, shape index: {}]
  %s13 = sld [smem:[#allocation0]]
  $region78: #{tpu_custom_call.1} parent=0
    _
  %s15 = ssub.s32 1, %s13
  %s16 = scalar_select 0, %s15, %s13
  %17 = sst [smem:[#allocation2]] %s10
  %18 = sst [smem:[#allocation3]] %s11
  $region1: #{tpu_custom_call.1} parent=0
    #allocation4 [shape = 'u8[16384]{0}', space=vmem, size = 0x4000, scoped, tag = 'input window, operand 0, single buffered']
    #allocation5 [shape = 's32[1]{0}', space=sflag, size = 0x4, scoped, tag = 'scoped memory for tpu_custom_call.1']
    #allocation6 [shape = 's32[1]{0}', space=sflag, size = 0x4, scoped, tag = 'scoped memory for tpu_custom_call.1']
    #allocation7 [shape = 'u8[12288]{0}', space=vmem, size = 0x3000, scoped, tag = 'input window, operand 1, single buffered']
    #allocation8 [shape = 's32[1]{0}', space=sflag, size = 0x4, scoped, tag = 'scoped memory for tpu_custom_call.1']
    #allocation9 [shape = 'u8[262144]{0}', space=vmem, size = 0x40000, scoped, tag = 'input window, operand 2, single buffered']
    #allocation10 [shape = 'u8[196608]{0}', space=vmem, size = 0x30000, scoped, tag = 'input window, operand 4, single buffered']
    #allocation11 [shape = 's32[1]{0}', space=sflag, size = 0x4, scoped, tag = 'scoped memory for tpu_custom_call.1']
    #allocation12 [shape = 'u8[65536]{0}', space=vmem, size = 0x10000, scoped, tag = 'input window, operand 8, single buffered']
    #allocation13 [shape = 'u8[4096]{0}', space=vmem, size = 0x1000, scoped, tag = 'output window, operand 0, single buffered']
    %19 = vsyncpa [#allocation5], 0
    %20 = vsyncpa [#allocation8], 0
    %21 = vsyncpa [#allocation11], 0
    %22 = vsyncpa [#allocation6], 0
    // Predicated region
    $region2: #{tpu_custom_call.1} parent=1 // pred_check
      _
    $region3: #{tpu_custom_call.1} parent=1 // pred_check_branch
      %24 = sbr.rel (0) target = $region5
    $region4: #{tpu_custom_call.1} parent=1 // pred_region
      %s26 = ssub.s32 512, 512
      %27 = vsyncadd [#allocation5], %s26
      %s29 = sshll.u32 [#allocation4], 4
      %s30 = int_to_ptr.vmem [resolvable:$true] %s29
      %32 = dma.hbm_to_vmem [thread:$0]  %s0, 512, %s30, [#allocation5]
    $region5: #{tpu_custom_call.1} parent=1 // pred_fallthru
      _
    // Predicated region
    $region6: #{tpu_custom_call.1} parent=1 // pred_check
      _
    $region7: #{tpu_custom_call.1} parent=1 // pred_check_branch
      %34 = sbr.rel (0) target = $region9
    $region8: #{tpu_custom_call.1} parent=1 // pred_region
      %s36 = ssub.s32 384, 384
      %37 = vsyncadd [#allocation8], %s36
      %s39 = sshll.u32 [#allocation7], 4
      %s40 = int_to_ptr.vmem [resolvable:$true] %s39
      %42 = dma.hbm_to_vmem [thread:$0]  %s1, 384, %s40, [#allocation8]
    $region9: #{tpu_custom_call.1} parent=1 // pred_fallthru
      _
    // Predicated region
    $region10: #{tpu_custom_call.1} parent=1 // pred_check
      _
    $region11: #{tpu_custom_call.1} parent=1 // pred_check_branch
      %44 = sbr.rel (0) target = $region13
    $region12: #{tpu_custom_call.1} parent=1 // pred_region
      %s46 = ssub.s32 8192, 8192
      %47 = vsyncadd [#allocation8], %s46
      %s48 = sshll.u32 [#allocation9], 4
      %s49 = int_to_ptr.vmem [resolvable:$true] %s48
      %54 = dma.hbm_to_vmem [thread:$0]  %s2, 8192, %s49, [#allocation8], 64, 64, 4
    $region13: #{tpu_custom_call.1} parent=1 // pred_fallthru
      _
    // Predicated region
    $region14: #{tpu_custom_call.1} parent=1 // pred_check
      _
    $region15: #{tpu_custom_call.1} parent=1 // pred_check_branch
      %56 = sbr.rel (0) target = $region17
    $region16: #{tpu_custom_call.1} parent=1 // pred_region
      _
    $region17: #{tpu_custom_call.1} parent=1 // pred_fallthru
      _
    // Predicated region
    $region18: #{tpu_custom_call.1} parent=1 // pred_check
      _
    $region19: #{tpu_custom_call.1} parent=1 // pred_check_branch
      %58 = sbr.rel (0) target = $region21
    $region20: #{tpu_custom_call.1} parent=1 // pred_region
      %s60 = ssub.s32 6144, 6144
      %61 = vsyncadd [#allocation11], %s60
      %s62 = sshll.u32 [#allocation10], 4
      %s63 = int_to_ptr.vmem [resolvable:$true] %s62
      %68 = dma.hbm_to_vmem [thread:$0]  %s4, 6144, %s63, [#allocation11], 64, 64, 4
    $region21: #{tpu_custom_call.1} parent=1 // pred_fallthru
      _
    // Predicated region
    $region22: #{tpu_custom_call.1} parent=1 // pred_check
      _
    $region23: #{tpu_custom_call.1} parent=1 // pred_check_branch
      %70 = sbr.rel (0) target = $region25
    $region24: #{tpu_custom_call.1} parent=1 // pred_region
      _
    $region25: #{tpu_custom_call.1} parent=1 // pred_fallthru
      _
    // Predicated region
    $region26: #{tpu_custom_call.1} parent=1 // pred_check
      _
    $region27: #{tpu_custom_call.1} parent=1 // pred_check_branch
      %72 = sbr.rel (0) target = $region29
    $region28: #{tpu_custom_call.1} parent=1 // pred_region
      _
    $region29: #{tpu_custom_call.1} parent=1 // pred_fallthru
      _
    // Predicated region
    $region30: #{tpu_custom_call.1} parent=1 // pred_check
      _
    $region31: #{tpu_custom_call.1} parent=1 // pred_check_branch
      %74 = sbr.rel (0) target = $region33
    $region32: #{tpu_custom_call.1} parent=1 // pred_region
      _
    $region33: #{tpu_custom_call.1} parent=1 // pred_fallthru
      _
    // Predicated region
    $region34: #{tpu_custom_call.1} parent=1 // pred_check
      _
    $region35: #{tpu_custom_call.1} parent=1 // pred_check_branch
      %76 = sbr.rel (0) target = $region37
    $region36: #{tpu_custom_call.1} parent=1 // pred_region
      %s78 = ssub.s32 2048, 2048
      %79 = vsyncadd [#allocation11], %s78
      %s80 = sshll.u32 [#allocation12], 4
      %s81 = int_to_ptr.vmem [resolvable:$true] %s80
      %86 = dma.hbm_to_vmem [thread:$0]  %s8, 2048, %s81, [#allocation11], 128, 128, 8
    $region37: #{tpu_custom_call.1} parent=1 // pred_fallthru
      _
    // Predicated region
    $region38: #{tpu_custom_call.1} parent=1 // pred_check
      _
    $region39: #{tpu_custom_call.1} parent=1 // pred_check_branch
      %88 = sbr.rel (0) target = $region41
    $region40: #{tpu_custom_call.1} parent=1 // pred_region
      _
    $region41: #{tpu_custom_call.1} parent=1 // pred_fallthru
      _
    // Predicated region
    $region42: #{tpu_custom_call.1} parent=1 // pred_check
      _
    $region43: #{tpu_custom_call.1} parent=1 // pred_check_branch
      %90 = sbr.rel (0) target = $region45
    $region44: #{tpu_custom_call.1} parent=1 // pred_region
      _
    $region45: #{tpu_custom_call.1} parent=1 // pred_fallthru
      _
    // Predicated region
    $region46: #{tpu_custom_call.1} parent=1 // pred_check
      _
    $region47: #{tpu_custom_call.1} parent=1 // pred_check_branch
      %92 = sbr.rel (0) target = $region49
    $region48: #{tpu_custom_call.1} parent=1 // pred_region
      _
    $region49: #{tpu_custom_call.1} parent=1 // pred_fallthru
      _
    // Predicated region
    $region50: #{tpu_custom_call.1} parent=1 // pred_check
      _
    $region51: #{tpu_custom_call.1} parent=1 // pred_check_branch
      %94 = sbr.rel (0) target = $region53
    $region52: #{tpu_custom_call.1} parent=1 // pred_region
      %95 = dma.done [#allocation5], 512
    $region53: #{tpu_custom_call.1} parent=1 // pred_fallthru
      _
    // Predicated region
    $region54: #{tpu_custom_call.1} parent=1 // pred_check
      _
    $region55: #{tpu_custom_call.1} parent=1 // pred_check_branch
      %97 = sbr.rel (0) target = $region57
    $region56: #{tpu_custom_call.1} parent=1 // pred_region
      %98 = dma.done [#allocation8], 384
    $region57: #{tpu_custom_call.1} parent=1 // pred_fallthru
      _
    // Predicated region
    $region58: #{tpu_custom_call.1} parent=1 // pred_check
      _
    $region59: #{tpu_custom_call.1} parent=1 // pred_check_branch
      %100 = sbr.rel (0) target = $region61
    $region60: #{tpu_custom_call.1} parent=1 // pred_region
      %101 = dma.done [#allocation8], 8192
    $region61: #{tpu_custom_call.1} parent=1 // pred_fallthru
      _
    // Predicated region
    $region62: #{tpu_custom_call.1} parent=1 // pred_check
      _
    $region63: #{tpu_custom_call.1} parent=1 // pred_check_branch
      %103 = sbr.rel (0) target = $region65
    $region64: #{tpu_custom_call.1} parent=1 // pred_region
      %104 = dma.done [#allocation11], 6144
    $region65: #{tpu_custom_call.1} parent=1 // pred_fallthru
      _
    // Predicated region
    $region66: #{tpu_custom_call.1} parent=1 // pred_check
      _
    $region67: #{tpu_custom_call.1} parent=1 // pred_check_branch
      %106 = sbr.rel (0) target = $region69
    $region68: #{tpu_custom_call.1} parent=1 // pred_region
      %107 = dma.done [#allocation11], 2048
    $region69: #{tpu_custom_call.1} parent=1 // pred_fallthru
      _
    %v109 = vld [vmem:[#allocation4] sm:$0xff]
    %v110 = vld [vmem:[#allocation4 + $0x8] sm:$0xff]
    %v111 = vld [vmem:[#allocation4 + $0x10] sm:$0xff]
    %v112 = vld [vmem:[#allocation4 + $0x18] sm:$0xff]
    %v113 = vld [vmem:[#allocation7] sm:$0xff]
    %v114 = vld [vmem:[#allocation7 + $0x8] sm:$0xff]
    %v115 = vld [vmem:[#allocation7 + $0x10] sm:$0xff]
    %v116 = vld [vmem:[#allocation9] sm:$0xf]
    %v117 = vld [vmem:[#allocation9 + $0x4] sm:$0xf]
    %v118 = vld [vmem:[#allocation9 + $0x8] sm:$0xf]
    %v119 = vld [vmem:[#allocation9 + $0xc] sm:$0xf]
    %v120 = vld [vmem:[#allocation9 + $0x10] sm:$0xf]
    %v121 = vld [vmem:[#allocation9 + $0x14] sm:$0xf]
    %v122 = vld [vmem:[#allocation9 + $0x18] sm:$0xf]
    %v123 = vld [vmem:[#allocation9 + $0x1c] sm:$0xf]
    %v124 = vld [vmem:[#allocation9 + $0x20] sm:$0xf]
    %v125 = vld [vmem:[#allocation9 + $0x24] sm:$0xf]
    %v126 = vld [vmem:[#allocation9 + $0x28] sm:$0xf]
    %v127 = vld [vmem:[#allocation9 + $0x2c] sm:$0xf]
    %v128 = vld [vmem:[#allocation9 + $0x30] sm:$0xf]
    %v129 = vld [vmem:[#allocation9 + $0x34] sm:$0xf]
    %v130 = vld [vmem:[#allocation9 + $0x38] sm:$0xf]
    %v131 = vld [vmem:[#allocation9 + $0x3c] sm:$0xf]
    %v132 = vld [vmem:[#allocation9 + $0x40] sm:$0xf]
    %v133 = vld [vmem:[#allocation9 + $0x44] sm:$0xf]
    %v134 = vld [vmem:[#allocation9 + $0x48] sm:$0xf]
    %v135 = vld [vmem:[#allocation9 + $0x4c] sm:$0xf]
    %v136 = vld [vmem:[#allocation9 + $0x50] sm:$0xf]
    %v137 = vld [vmem:[#allocation9 + $0x54] sm:$0xf]
    %v138 = vld [vmem:[#allocation9 + $0x58] sm:$0xf]
    %v139 = vld [vmem:[#allocation9 + $0x5c] sm:$0xf]
    %v140 = vld [vmem:[#allocation9 + $0x60] sm:$0xf]
    %v141 = vld [vmem:[#allocation9 + $0x64] sm:$0xf]
    %v142 = vld [vmem:[#allocation9 + $0x68] sm:$0xf]
    %v143 = vld [vmem:[#allocation9 + $0x6c] sm:$0xf]
    %v144 = vld [vmem:[#allocation9 + $0x70] sm:$0xf]
    %v145 = vld [vmem:[#allocation9 + $0x74] sm:$0xf]
    %v146 = vld [vmem:[#allocation9 + $0x78] sm:$0xf]
    %v147 = vld [vmem:[#allocation9 + $0x7c] sm:$0xf]
    %v148 = vld [vmem:[#allocation9 + $0x80] sm:$0xf]
    %v149 = vld [vmem:[#allocation9 + $0x84] sm:$0xf]
    %v150 = vld [vmem:[#allocation9 + $0x88] sm:$0xf]
    %v151 = vld [vmem:[#allocation9 + $0x8c] sm:$0xf]
    %v152 = vld [vmem:[#allocation9 + $0x90] sm:$0xf]
    %v153 = vld [vmem:[#allocation9 + $0x94] sm:$0xf]
    %v154 = vld [vmem:[#allocation9 + $0x98] sm:$0xf]
    %v155 = vld [vmem:[#allocation9 + $0x9c] sm:$0xf]
    %v156 = vld [vmem:[#allocation9 + $0xa0] sm:$0xf]
    %v157 = vld [vmem:[#allocation9 + $0xa4] sm:$0xf]
    %v158 = vld [vmem:[#allocation9 + $0xa8] sm:$0xf]
    %v159 = vld [vmem:[#allocation9 + $0xac] sm:$0xf]
    %v160 = vld [vmem:[#allocation9 + $0xb0] sm:$0xf]
    %v161 = vld [vmem:[#allocation9 + $0xb4] sm:$0xf]
    %v162 = vld [vmem:[#allocation9 + $0xb8] sm:$0xf]
    %v163 = vld [vmem:[#allocation9 + $0xbc] sm:$0xf]
    %v164 = vld [vmem:[#allocation9 + $0xc0] sm:$0xf]
    %v165 = vld [vmem:[#allocation9 + $0xc4] sm:$0xf]
    %v166 = vld [vmem:[#allocation9 + $0xc8] sm:$0xf]
    %v167 = vld [vmem:[#allocation9 + $0xcc] sm:$0xf]
    %v168 = vld [vmem:[#allocation9 + $0xd0] sm:$0xf]
    %v169 = vld [vmem:[#allocation9 + $0xd4] sm:$0xf]
    %v170 = vld [vmem:[#allocation9 + $0xd8] sm:$0xf]
    %v171 = vld [vmem:[#allocation9 + $0xdc] sm:$0xf]
    %v172 = vld [vmem:[#allocation9 + $0xe0] sm:$0xf]
    %v173 = vld [vmem:[#allocation9 + $0xe4] sm:$0xf]
    %v174 = vld [vmem:[#allocation9 + $0xe8] sm:$0xf]
    %v175 = vld [vmem:[#allocation9 + $0xec] sm:$0xf]
    %v176 = vld [vmem:[#allocation9 + $0xf0] sm:$0xf]
    %v177 = vld [vmem:[#allocation9 + $0xf4] sm:$0xf]
    %v178 = vld [vmem:[#allocation9 + $0xf8] sm:$0xf]
    %v179 = vld [vmem:[#allocation9 + $0xfc] sm:$0xf]
    %v180 = vld [vmem:[#allocation9 + $0x100] sm:$0xf]
    %v181 = vld [vmem:[#allocation9 + $0x104] sm:$0xf]
    %v182 = vld [vmem:[#allocation9 + $0x108] sm:$0xf]
    %v183 = vld [vmem:[#allocation9 + $0x10c] sm:$0xf]
    %v184 = vld [vmem:[#allocation9 + $0x110] sm:$0xf]
    %v185 = vld [vmem:[#allocation9 + $0x114] sm:$0xf]
    %v186 = vld [vmem:[#allocation9 + $0x118] sm:$0xf]
    %v187 = vld [vmem:[#allocation9 + $0x11c] sm:$0xf]
    %v188 = vld [vmem:[#allocation9 + $0x120] sm:$0xf]
    %v189 = vld [vmem:[#allocation9 + $0x124] sm:$0xf]
    %v190 = vld [vmem:[#allocation9 + $0x128] sm:$0xf]
    %v191 = vld [vmem:[#allocation9 + $0x12c] sm:$0xf]
    %v192 = vld [vmem:[#allocation9 + $0x130] sm:$0xf]
    %v193 = vld [vmem:[#allocation9 + $0x134] sm:$0xf]
    %v194 = vld [vmem:[#allocation9 + $0x138] sm:$0xf]
    %v195 = vld [vmem:[#allocation9 + $0x13c] sm:$0xf]
    %v196 = vld [vmem:[#allocation9 + $0x140] sm:$0xf]
    %v197 = vld [vmem:[#allocation9 + $0x144] sm:$0xf]
    %v198 = vld [vmem:[#allocation9 + $0x148] sm:$0xf]
    %v199 = vld [vmem:[#allocation9 + $0x14c] sm:$0xf]
    %v200 = vld [vmem:[#allocation9 + $0x150] sm:$0xf]
    %v201 = vld [vmem:[#allocation9 + $0x154] sm:$0xf]
    %v202 = vld [vmem:[#allocation9 + $0x158] sm:$0xf]
    %v203 = vld [vmem:[#allocation9 + $0x15c] sm:$0xf]
    %v204 = vld [vmem:[#allocation9 + $0x160] sm:$0xf]
    %v205 = vld [vmem:[#allocation9 + $0x164] sm:$0xf]
    %v206 = vld [vmem:[#allocation9 + $0x168] sm:$0xf]
    %v207 = vld [vmem:[#allocation9 + $0x16c] sm:$0xf]
    %v208 = vld [vmem:[#allocation9 + $0x170] sm:$0xf]
    %v209 = vld [vmem:[#allocation9 + $0x174] sm:$0xf]
    %v210 = vld [vmem:[#allocation9 + $0x178] sm:$0xf]
    %v211 = vld [vmem:[#allocation9 + $0x17c] sm:$0xf]
    %v212 = vld [vmem:[#allocation9 + $0x180] sm:$0xf]
    %v213 = vld [vmem:[#allocation9 + $0x184] sm:$0xf]
    %v214 = vld [vmem:[#allocation9 + $0x188] sm:$0xf]
    %v215 = vld [vmem:[#allocation9 + $0x18c] sm:$0xf]
    %v216 = vld [vmem:[#allocation9 + $0x190] sm:$0xf]
    %v217 = vld [vmem:[#allocation9 + $0x194] sm:$0xf]
    %v218 = vld [vmem:[#allocation9 + $0x198] sm:$0xf]
    %v219 = vld [vmem:[#allocation9 + $0x19c] sm:$0xf]
    %v220 = vld [vmem:[#allocation9 + $0x1a0] sm:$0xf]
    %v221 = vld [vmem:[#allocation9 + $0x1a4] sm:$0xf]
    %v222 = vld [vmem:[#allocation9 + $0x1a8] sm:$0xf]
    %v223 = vld [vmem:[#allocation9 + $0x1ac] sm:$0xf]
    %v224 = vld [vmem:[#allocation9 + $0x1b0] sm:$0xf]
    %v225 = vld [vmem:[#allocation9 + $0x1b4] sm:$0xf]
    %v226 = vld [vmem:[#allocation9 + $0x1b8] sm:$0xf]
    %v227 = vld [vmem:[#allocation9 + $0x1bc] sm:$0xf]
    %v228 = vld [vmem:[#allocation9 + $0x1c0] sm:$0xf]
    %v229 = vld [vmem:[#allocation9 + $0x1c4] sm:$0xf]
    %v230 = vld [vmem:[#allocation9 + $0x1c8] sm:$0xf]
    %v231 = vld [vmem:[#allocation9 + $0x1cc] sm:$0xf]
    %v232 = vld [vmem:[#allocation9 + $0x1d0] sm:$0xf]
    %v233 = vld [vmem:[#allocation9 + $0x1d4] sm:$0xf]
    %v234 = vld [vmem:[#allocation9 + $0x1d8] sm:$0xf]
    %v235 = vld [vmem:[#allocation9 + $0x1dc] sm:$0xf]
    %v236 = vld [vmem:[#allocation9 + $0x1e0] sm:$0xf]
    %v237 = vld [vmem:[#allocation9 + $0x1e4] sm:$0xf]
    %v238 = vld [vmem:[#allocation9 + $0x1e8] sm:$0xf]
    %v239 = vld [vmem:[#allocation9 + $0x1ec] sm:$0xf]
    %v240 = vld [vmem:[#allocation9 + $0x1f0] sm:$0xf]
    %v241 = vld [vmem:[#allocation9 + $0x1f4] sm:$0xf]
    %v242 = vld [vmem:[#allocation9 + $0x1f8] sm:$0xf]
    %v243 = vld [vmem:[#allocation9 + $0x1fc] sm:$0xf]
    %v244 = vld [vmem:[%s3] sm:$0x1]
    %v246 = vlaneseq
    %v247 = vshrl.u32 %v246, 7
    %v248 = vsub.s32 0, %v247
    %v249 = vrot.slane %v244, %v248
    %v255 = vunpack.c.l.b16 %v109
    %v256 = vunpack.c.h.b16 %v109
    %v257 = vunpack.c.l.b16 %v110
    %v258 = vunpack.c.h.b16 %v110
    %v259 = vunpack.c.l.b16 %v111
    %v260 = vunpack.c.h.b16 %v111
    %v261 = vunpack.c.l.b16 %v112
    %v262 = vunpack.c.h.b16 %v112
    %v263 = vpack.c.b16 %v255, %v255
    %v264 = vpack.c.b16 %v256, %v256
    %v265 = vpack.c.b16 %v257, %v257
    %v266 = vpack.c.b16 %v258, %v258
    %v267 = vpack.c.b16 %v259, %v259
    %v268 = vpack.c.b16 %v260, %v260
    %v269 = vpack.c.b16 %v261, %v261
    %v270 = vpack.c.b16 %v262, %v262
    %v407 = vunpack.c.l.b16 %v116
    %v408 = vunpack.c.l.b16 %v117
    %v409 = vunpack.c.l.b16 %v118
    %v410 = vunpack.c.l.b16 %v119
    %v411 = vunpack.c.l.b16 %v120
    %v412 = vunpack.c.l.b16 %v121
    %v413 = vunpack.c.l.b16 %v122
    %v414 = vunpack.c.l.b16 %v123
    %v415 = vunpack.c.l.b16 %v124
    %v416 = vunpack.c.l.b16 %v125
    %v417 = vunpack.c.l.b16 %v126
    %v418 = vunpack.c.l.b16 %v127
    %v419 = vunpack.c.l.b16 %v128
    %v420 = vunpack.c.l.b16 %v129
    %v421 = vunpack.c.l.b16 %v130
    %v422 = vunpack.c.l.b16 %v131
    %v423 = vunpack.c.l.b16 %v132
    %v424 = vunpack.c.l.b16 %v133
    %v425 = vunpack.c.l.b16 %v134
    %v426 = vunpack.c.l.b16 %v135
    %v427 = vunpack.c.l.b16 %v136
    %v428 = vunpack.c.l.b16 %v137
    %v429 = vunpack.c.l.b16 %v138
    %v430 = vunpack.c.l.b16 %v139
    %v431 = vunpack.c.l.b16 %v140
    %v432 = vunpack.c.l.b16 %v141
    %v433 = vunpack.c.l.b16 %v142
    %v434 = vunpack.c.l.b16 %v143
    %v435 = vunpack.c.l.b16 %v144
    %v436 = vunpack.c.l.b16 %v145
    %v437 = vunpack.c.l.b16 %v146
    %v438 = vunpack.c.l.b16 %v147
    %v439 = vunpack.c.l.b16 %v148
    %v440 = vunpack.c.l.b16 %v149
    %v441 = vunpack.c.l.b16 %v150
    %v442 = vunpack.c.l.b16 %v151
    %v443 = vunpack.c.l.b16 %v152
    %v444 = vunpack.c.l.b16 %v153
    %v445 = vunpack.c.l.b16 %v154
    %v446 = vunpack.c.l.b16 %v155
    %v447 = vunpack.c.l.b16 %v156
    %v448 = vunpack.c.l.b16 %v157
    %v449 = vunpack.c.l.b16 %v158
    %v450 = vunpack.c.l.b16 %v159
    %v451 = vunpack.c.l.b16 %v160
    %v452 = vunpack.c.l.b16 %v161
    %v453 = vunpack.c.l.b16 %v162
    %v454 = vunpack.c.l.b16 %v163
    %v455 = vunpack.c.l.b16 %v164
    %v456 = vunpack.c.l.b16 %v165
    %v457 = vunpack.c.l.b16 %v166
    %v458 = vunpack.c.l.b16 %v167
    %v459 = vunpack.c.l.b16 %v168
    %v460 = vunpack.c.l.b16 %v169
    %v461 = vunpack.c.l.b16 %v170
    %v462 = vunpack.c.l.b16 %v171
    %v463 = vunpack.c.l.b16 %v172
    %v464 = vunpack.c.l.b16 %v173
    %v465 = vunpack.c.l.b16 %v174
    %v466 = vunpack.c.l.b16 %v175
    %v467 = vunpack.c.l.b16 %v176
    %v468 = vunpack.c.l.b16 %v177
    %v469 = vunpack.c.l.b16 %v178
    %v470 = vunpack.c.l.b16 %v179
    %v471 = vunpack.c.l.b16 %v180
    %v472 = vunpack.c.l.b16 %v181
    %v473 = vunpack.c.l.b16 %v182
    %v474 = vunpack.c.l.b16 %v183
    %v475 = vunpack.c.l.b16 %v184
    %v476 = vunpack.c.l.b16 %v185
    %v477 = vunpack.c.l.b16 %v186
    %v478 = vunpack.c.l.b16 %v187
    %v479 = vunpack.c.l.b16 %v188
    %v480 = vunpack.c.l.b16 %v189
    %v481 = vunpack.c.l.b16 %v190
    %v482 = vunpack.c.l.b16 %v191
    %v483 = vunpack.c.l.b16 %v192
    %v484 = vunpack.c.l.b16 %v193
    %v485 = vunpack.c.l.b16 %v194
    %v486 = vunpack.c.l.b16 %v195
    %v487 = vunpack.c.l.b16 %v196
    %v488 = vunpack.c.l.b16 %v197
    %v489 = vunpack.c.l.b16 %v198
    %v490 = vunpack.c.l.b16 %v199
    %v491 = vunpack.c.l.b16 %v200
    %v492 = vunpack.c.l.b16 %v201
    %v493 = vunpack.c.l.b16 %v202
    %v494 = vunpack.c.l.b16 %v203
    %v495 = vunpack.c.l.b16 %v204
    %v496 = vunpack.c.l.b16 %v205
    %v497 = vunpack.c.l.b16 %v206
    %v498 = vunpack.c.l.b16 %v207
    %v499 = vunpack.c.l.b16 %v208
    %v500 = vunpack.c.l.b16 %v209
    %v501 = vunpack.c.l.b16 %v210
    %v502 = vunpack.c.l.b16 %v211
    %v503 = vunpack.c.l.b16 %v212
    %v504 = vunpack.c.l.b16 %v213
    %v505 = vunpack.c.l.b16 %v214
    %v506 = vunpack.c.l.b16 %v215
    %v507 = vunpack.c.l.b16 %v216
    %v508 = vunpack.c.l.b16 %v217
    %v509 = vunpack.c.l.b16 %v218
    %v510 = vunpack.c.l.b16 %v219
    %v511 = vunpack.c.l.b16 %v220
    %v512 = vunpack.c.l.b16 %v221
    %v513 = vunpack.c.l.b16 %v222
    %v514 = vunpack.c.l.b16 %v223
    %v515 = vunpack.c.l.b16 %v224
    %v516 = vunpack.c.l.b16 %v225
    %v517 = vunpack.c.l.b16 %v226
    %v518 = vunpack.c.l.b16 %v227
    %v519 = vunpack.c.l.b16 %v228
    %v520 = vunpack.c.l.b16 %v229
    %v521 = vunpack.c.l.b16 %v230
    %v522 = vunpack.c.l.b16 %v231
    %v523 = vunpack.c.l.b16 %v232
    %v524 = vunpack.c.l.b16 %v233
    %v525 = vunpack.c.l.b16 %v234
    %v526 = vunpack.c.l.b16 %v235
    %v527 = vunpack.c.l.b16 %v236
    %v528 = vunpack.c.l.b16 %v237
    %v529 = vunpack.c.l.b16 %v238
    %v530 = vunpack.c.l.b16 %v239
    %v531 = vunpack.c.l.b16 %v240
    %v532 = vunpack.c.l.b16 %v241
    %v533 = vunpack.c.l.b16 %v242
    %v534 = vunpack.c.l.b16 %v243
    %v535 = vpack.c.b16 %v408, %v407
    %v536 = vpack.c.b16 %v410, %v409
    %v537 = vpack.c.b16 %v412, %v411
    %v538 = vpack.c.b16 %v414, %v413
    %v539 = vpack.c.b16 %v416, %v415
    %v540 = vpack.c.b16 %v418, %v417
    %v541 = vpack.c.b16 %v420, %v419
    %v542 = vpack.c.b16 %v422, %v421
    %v543 = vpack.c.b16 %v424, %v423
    %v544 = vpack.c.b16 %v426, %v425
    %v545 = vpack.c.b16 %v428, %v427
    %v546 = vpack.c.b16 %v430, %v429
    %v547 = vpack.c.b16 %v432, %v431
    %v548 = vpack.c.b16 %v434, %v433
    %v549 = vpack.c.b16 %v436, %v435
    %v550 = vpack.c.b16 %v438, %v437
    %v551 = vpack.c.b16 %v440, %v439
    %v552 = vpack.c.b16 %v442, %v441
    %v553 = vpack.c.b16 %v444, %v443
    %v554 = vpack.c.b16 %v446, %v445
    %v555 = vpack.c.b16 %v448, %v447
    %v556 = vpack.c.b16 %v450, %v449
    %v557 = vpack.c.b16 %v452, %v451
    %v558 = vpack.c.b16 %v454, %v453
    %v559 = vpack.c.b16 %v456, %v455
    %v560 = vpack.c.b16 %v458, %v457
    %v561 = vpack.c.b16 %v460, %v459
    %v562 = vpack.c.b16 %v462, %v461
    %v563 = vpack.c.b16 %v464, %v463
    %v564 = vpack.c.b16 %v466, %v465
    %v565 = vpack.c.b16 %v468, %v467
    %v566 = vpack.c.b16 %v470, %v469
    %v567 = vpack.c.b16 %v472, %v471
    %v568 = vpack.c.b16 %v474, %v473
    %v569 = vpack.c.b16 %v476, %v475
    %v570 = vpack.c.b16 %v478, %v477
    %v571 = vpack.c.b16 %v480, %v479
    %v572 = vpack.c.b16 %v482, %v481
    %v573 = vpack.c.b16 %v484, %v483
    %v574 = vpack.c.b16 %v486, %v485
    %v575 = vpack.c.b16 %v488, %v487
    %v576 = vpack.c.b16 %v490, %v489
    %v577 = vpack.c.b16 %v492, %v491
    %v578 = vpack.c.b16 %v494, %v493
    %v579 = vpack.c.b16 %v496, %v495
    %v580 = vpack.c.b16 %v498, %v497
    %v581 = vpack.c.b16 %v500, %v499
    %v582 = vpack.c.b16 %v502, %v501
    %v583 = vpack.c.b16 %v504, %v503
    %v584 = vpack.c.b16 %v506, %v505
    %v585 = vpack.c.b16 %v508, %v507
    %v586 = vpack.c.b16 %v510, %v509
    %v587 = vpack.c.b16 %v512, %v511
    %v588 = vpack.c.b16 %v514, %v513
    %v589 = vpack.c.b16 %v516, %v515
    %v590 = vpack.c.b16 %v518, %v517
    %v591 = vpack.c.b16 %v520, %v519
    %v592 = vpack.c.b16 %v522, %v521
    %v593 = vpack.c.b16 %v524, %v523
    %v594 = vpack.c.b16 %v526, %v525
    %v595 = vpack.c.b16 %v528, %v527
    %v596 = vpack.c.b16 %v530, %v529
    %v597 = vpack.c.b16 %v532, %v531
    %v598 = vpack.c.b16 %v534, %v533
    %663 = vmatprep.subr.bf16.mxu0 0
    %664 = vmatpush1.bf16.msra.mxu0 %v535
    %665 = vmatprep.subr.bf16.mxu0 0
    %666 = vmatpush1.bf16.msra.mxu0 %v536
    %667 = vmatprep.subr.bf16.mxu0 0
    %668 = vmatpush1.bf16.msra.mxu0 %v537
    %669 = vmatprep.subr.bf16.mxu0 0
    %670 = vmatpush1.bf16.msra.mxu0 %v538
    %671 = vmatprep.subr.bf16.mxu0 0
    %672 = vmatpush1.bf16.msra.mxu0 %v539
    %673 = vmatprep.subr.bf16.mxu0 0
    %674 = vmatpush1.bf16.msra.mxu0 %v540
    %675 = vmatprep.subr.bf16.mxu0 0
    %676 = vmatpush1.bf16.msra.mxu0 %v541
    %677 = vmatprep.subr.bf16.mxu0 0
    %678 = vmatpush1.bf16.msra.mxu0 %v542
    %679 = vmatprep.subr.bf16.mxu0 0
    %680 = vmatpush1.bf16.msra.mxu0 %v543
    %681 = vmatprep.subr.bf16.mxu0 0
    %682 = vmatpush1.bf16.msra.mxu0 %v544
    %683 = vmatprep.subr.bf16.mxu0 0
    %684 = vmatpush1.bf16.msra.mxu0 %v545
    %685 = vmatprep.subr.bf16.mxu0 0
    %686 = vmatpush1.bf16.msra.mxu0 %v546
    %687 = vmatprep.subr.bf16.mxu0 0
    %688 = vmatpush1.bf16.msra.mxu0 %v547
    %689 = vmatprep.subr.bf16.mxu0 0
    %690 = vmatpush1.bf16.msra.mxu0 %v548
    %691 = vmatprep.subr.bf16.mxu0 0
    %692 = vmatpush1.bf16.msra.mxu0 %v549
    %693 = vmatprep.subr.bf16.mxu0 0
    %694 = vmatpush1.bf16.msra.mxu0 %v550
    %695 = vmatprep.mubr.bf16.mxu0 %v264
    %696 = vmatmul.mubr.bf16.gmra.mrb[0].mxu0 %v263
    %v697 = vpop.f32.mrb[0].mxu0
    %v698 = vadd.f32 %v249, %v697
    %v699 = vpop.f32.mrb[0].mxu0
    %v700 = vpop.f32.mrb[0].mxu0
    %v701 = vpop.f32.mrb[0].mxu0
    %702 = vdwg.mxu0
    %703 = vmatprep.subr.bf16.mxu0 0
    %704 = vmatpush1.bf16.msra.mxu0 %v551
    %705 = vmatprep.subr.bf16.mxu0 0
    %706 = vmatpush1.bf16.msra.mxu0 %v552
    %707 = vmatprep.subr.bf16.mxu0 0
    %708 = vmatpush1.bf16.msra.mxu0 %v553
    %709 = vmatprep.subr.bf16.mxu0 0
    %710 = vmatpush1.bf16.msra.mxu0 %v554
    %711 = vmatprep.subr.bf16.mxu0 0
    %712 = vmatpush1.bf16.msra.mxu0 %v555
    %713 = vmatprep.subr.bf16.mxu0 0
    %714 = vmatpush1.bf16.msra.mxu0 %v556
    %715 = vmatprep.subr.bf16.mxu0 0
    %716 = vmatpush1.bf16.msra.mxu0 %v557
    %717 = vmatprep.subr.bf16.mxu0 0
    %718 = vmatpush1.bf16.msra.mxu0 %v558
    %719 = vmatprep.subr.bf16.mxu0 0
    %720 = vmatpush1.bf16.msra.mxu0 %v559
    %721 = vmatprep.subr.bf16.mxu0 0
    %722 = vmatpush1.bf16.msra.mxu0 %v560
    %723 = vmatprep.subr.bf16.mxu0 0
    %724 = vmatpush1.bf16.msra.mxu0 %v561
    %725 = vmatprep.subr.bf16.mxu0 0
    %726 = vmatpush1.bf16.msra.mxu0 %v562
    %727 = vmatprep.subr.bf16.mxu0 0
    %728 = vmatpush1.bf16.msra.mxu0 %v563
    %729 = vmatprep.subr.bf16.mxu0 0
    %730 = vmatpush1.bf16.msra.mxu0 %v564
    %731 = vmatprep.subr.bf16.mxu0 0
    %732 = vmatpush1.bf16.msra.mxu0 %v565
    %733 = vmatprep.subr.bf16.mxu0 0
    %734 = vmatpush1.bf16.msra.mxu0 %v566
    %735 = vmatprep.mubr.bf16.mxu0 %v266
    %736 = vmatmul.mubr.bf16.gmra.mrb[0].mxu0 %v265
    %v737 = vpop.f32.mrb[0].mxu0
    %v738 = vadd.f32 %v698, %v737
    %v739 = vpop.f32.mrb[0].mxu0
    %v740 = vpop.f32.mrb[0].mxu0
    %v741 = vpop.f32.mrb[0].mxu0
    %742 = vdwg.mxu0
    %743 = vmatprep.subr.bf16.mxu0 0
    %744 = vmatpush1.bf16.msra.mxu0 %v567
    %745 = vmatprep.subr.bf16.mxu0 0
    %746 = vmatpush1.bf16.msra.mxu0 %v568
    %747 = vmatprep.subr.bf16.mxu0 0
    %748 = vmatpush1.bf16.msra.mxu0 %v569
    %749 = vmatprep.subr.bf16.mxu0 0
    %750 = vmatpush1.bf16.msra.mxu0 %v570
    %751 = vmatprep.subr.bf16.mxu0 0
    %752 = vmatpush1.bf16.msra.mxu0 %v571
    %753 = vmatprep.subr.bf16.mxu0 0
    %754 = vmatpush1.bf16.msra.mxu0 %v572
    %755 = vmatprep.subr.bf16.mxu0 0
    %756 = vmatpush1.bf16.msra.mxu0 %v573
    %757 = vmatprep.subr.bf16.mxu0 0
    %758 = vmatpush1.bf16.msra.mxu0 %v574
    %759 = vmatprep.subr.bf16.mxu0 0
    %760 = vmatpush1.bf16.msra.mxu0 %v575
    %761 = vmatprep.subr.bf16.mxu0 0
    %762 = vmatpush1.bf16.msra.mxu0 %v576
    %763 = vmatprep.subr.bf16.mxu0 0
    %764 = vmatpush1.bf16.msra.mxu0 %v577
    %765 = vmatprep.subr.bf16.mxu0 0
    %766 = vmatpush1.bf16.msra.mxu0 %v578
    %767 = vmatprep.subr.bf16.mxu0 0
    %768 = vmatpush1.bf16.msra.mxu0 %v579
    %769 = vmatprep.subr.bf16.mxu0 0
    %770 = vmatpush1.bf16.msra.mxu0 %v580
    %771 = vmatprep.subr.bf16.mxu0 0
    %772 = vmatpush1.bf16.msra.mxu0 %v581
    %773 = vmatprep.subr.bf16.mxu0 0
    %774 = vmatpush1.bf16.msra.mxu0 %v582
    %775 = vmatprep.mubr.bf16.mxu0 %v268
    %776 = vmatmul.mubr.bf16.gmra.mrb[0].mxu0 %v267
    %v777 = vpop.f32.mrb[0].mxu0
    %v778 = vadd.f32 %v738, %v777
    %v779 = vpop.f32.mrb[0].mxu0
    %v780 = vpop.f32.mrb[0].mxu0
    %v781 = vpop.f32.mrb[0].mxu0
    %782 = vdwg.mxu0
    %783 = vmatprep.subr.bf16.mxu0 0
    %784 = vmatpush1.bf16.msra.mxu0 %v583
    %785 = vmatprep.subr.bf16.mxu0 0
    %786 = vmatpush1.bf16.msra.mxu0 %v584
    %787 = vmatprep.subr.bf16.mxu0 0
    %788 = vmatpush1.bf16.msra.mxu0 %v585
    %789 = vmatprep.subr.bf16.mxu0 0
    %790 = vmatpush1.bf16.msra.mxu0 %v586
    %791 = vmatprep.subr.bf16.mxu0 0
    %792 = vmatpush1.bf16.msra.mxu0 %v587
    %793 = vmatprep.subr.bf16.mxu0 0
    %794 = vmatpush1.bf16.msra.mxu0 %v588
    %795 = vmatprep.subr.bf16.mxu0 0
    %796 = vmatpush1.bf16.msra.mxu0 %v589
    %797 = vmatprep.subr.bf16.mxu0 0
    %798 = vmatpush1.bf16.msra.mxu0 %v590
    %799 = vmatprep.subr.bf16.mxu0 0
    %800 = vmatpush1.bf16.msra.mxu0 %v591
    %801 = vmatprep.subr.bf16.mxu0 0
    %802 = vmatpush1.bf16.msra.mxu0 %v592
    %803 = vmatprep.subr.bf16.mxu0 0
    %804 = vmatpush1.bf16.msra.mxu0 %v593
    %805 = vmatprep.subr.bf16.mxu0 0
    %806 = vmatpush1.bf16.msra.mxu0 %v594
    %807 = vmatprep.subr.bf16.mxu0 0
    %808 = vmatpush1.bf16.msra.mxu0 %v595
    %809 = vmatprep.subr.bf16.mxu0 0
    %810 = vmatpush1.bf16.msra.mxu0 %v596
    %811 = vmatprep.subr.bf16.mxu0 0
    %812 = vmatpush1.bf16.msra.mxu0 %v597
    %813 = vmatprep.subr.bf16.mxu0 0
    %814 = vmatpush1.bf16.msra.mxu0 %v598
    %815 = vmatprep.mubr.bf16.mxu0 %v270
    %816 = vmatmul.mubr.bf16.gmra.mrb[0].mxu0 %v269
    %v817 = vpop.f32.mrb[0].mxu0
    %v818 = vadd.f32 %v778, %v817
    %v819 = vpop.f32.mrb[0].mxu0
    %v820 = vpop.f32.mrb[0].mxu0
    %v821 = vpop.f32.mrb[0].mxu0
    %822 = vdwg.mxu0
    %v823 = vmax.f32 %v818, 0.0
    %v824 = vld [vmem:[%s6] sm:$0x1]
    %v826 = vlaneseq
    %v827 = vshrl.u32 %v826, 7
    %v828 = vsub.s32 0, %v827
    %v829 = vrot.slane %v824, %v828
    %v831 = vmul.f32 %v823, %v829
    %832 = vadd.xlane.f32.xlu0 %v831
    %v833 = vpop.xlane.xlu0 %832
    %s834 = sld [smem:[#allocation2]]
    %v835 = vstv %s834
    %v836 = vadd.f32 %v833, %v835
    %v837 = vld [vmem:[#allocation10] sm:$0xf]
    %v838 = vld [vmem:[#allocation10 + $0x4] sm:$0xf]
    %v839 = vld [vmem:[#allocation10 + $0x8] sm:$0xf]
    %v840 = vld [vmem:[#allocation10 + $0xc] sm:$0xf]
    %v841 = vld [vmem:[#allocation10 + $0x10] sm:$0xf]
    %v842 = vld [vmem:[#allocation10 + $0x14] sm:$0xf]
    %v843 = vld [vmem:[#allocation10 + $0x18] sm:$0xf]
    %v844 = vld [vmem:[#allocation10 + $0x1c] sm:$0xf]
    %v845 = vld [vmem:[#allocation10 + $0x20] sm:$0xf]
    %v846 = vld [vmem:[#allocation10 + $0x24] sm:$0xf]
    %v847 = vld [vmem:[#allocation10 + $0x28] sm:$0xf]
    %v848 = vld [vmem:[#allocation10 + $0x2c] sm:$0xf]
    %v849 = vld [vmem:[#allocation10 + $0x30] sm:$0xf]
    %v850 = vld [vmem:[#allocation10 + $0x34] sm:$0xf]
    %v851 = vld [vmem:[#allocation10 + $0x38] sm:$0xf]
    %v852 = vld [vmem:[#allocation10 + $0x3c] sm:$0xf]
    %v853 = vld [vmem:[#allocation10 + $0x40] sm:$0xf]
    %v854 = vld [vmem:[#allocation10 + $0x44] sm:$0xf]
    %v855 = vld [vmem:[#allocation10 + $0x48] sm:$0xf]
    %v856 = vld [vmem:[#allocation10 + $0x4c] sm:$0xf]
    %v857 = vld [vmem:[#allocation10 + $0x50] sm:$0xf]
    %v858 = vld [vmem:[#allocation10 + $0x54] sm:$0xf]
    %v859 = vld [vmem:[#allocation10 + $0x58] sm:$0xf]
    %v860 = vld [vmem:[#allocation10 + $0x5c] sm:$0xf]
    %v861 = vld [vmem:[#allocation10 + $0x60] sm:$0xf]
    %v862 = vld [vmem:[#allocation10 + $0x64] sm:$0xf]
    %v863 = vld [vmem:[#allocation10 + $0x68] sm:$0xf]
    %v864 = vld [vmem:[#allocation10 + $0x6c] sm:$0xf]
    %v865 = vld [vmem:[#allocation10 + $0x70] sm:$0xf]
    %v866 = vld [vmem:[#allocation10 + $0x74] sm:$0xf]
    %v867 = vld [vmem:[#allocation10 + $0x78] sm:$0xf]
    %v868 = vld [vmem:[#allocation10 + $0x7c] sm:$0xf]
    %v869 = vld [vmem:[#allocation10 + $0x80] sm:$0xf]
    %v870 = vld [vmem:[#allocation10 + $0x84] sm:$0xf]
    %v871 = vld [vmem:[#allocation10 + $0x88] sm:$0xf]
    %v872 = vld [vmem:[#allocation10 + $0x8c] sm:$0xf]
    %v873 = vld [vmem:[#allocation10 + $0x90] sm:$0xf]
    %v874 = vld [vmem:[#allocation10 + $0x94] sm:$0xf]
    %v875 = vld [vmem:[#allocation10 + $0x98] sm:$0xf]
    %v876 = vld [vmem:[#allocation10 + $0x9c] sm:$0xf]
    %v877 = vld [vmem:[#allocation10 + $0xa0] sm:$0xf]
    %v878 = vld [vmem:[#allocation10 + $0xa4] sm:$0xf]
    %v879 = vld [vmem:[#allocation10 + $0xa8] sm:$0xf]
    %v880 = vld [vmem:[#allocation10 + $0xac] sm:$0xf]
    %v881 = vld [vmem:[#allocation10 + $0xb0] sm:$0xf]
    %v882 = vld [vmem:[#allocation10 + $0xb4] sm:$0xf]
    %v883 = vld [vmem:[#allocation10 + $0xb8] sm:$0xf]
    %v884 = vld [vmem:[#allocation10 + $0xbc] sm:$0xf]
    %v885 = vld [vmem:[#allocation10 + $0xc0] sm:$0xf]
    %v886 = vld [vmem:[#allocation10 + $0xc4] sm:$0xf]
    %v887 = vld [vmem:[#allocation10 + $0xc8] sm:$0xf]
    %v888 = vld [vmem:[#allocation10 + $0xcc] sm:$0xf]
    %v889 = vld [vmem:[#allocation10 + $0xd0] sm:$0xf]
    %v890 = vld [vmem:[#allocation10 + $0xd4] sm:$0xf]
    %v891 = vld [vmem:[#allocation10 + $0xd8] sm:$0xf]
    %v892 = vld [vmem:[#allocation10 + $0xdc] sm:$0xf]
    %v893 = vld [vmem:[#allocation10 + $0xe0] sm:$0xf]
    %v894 = vld [vmem:[#allocation10 + $0xe4] sm:$0xf]
    %v895 = vld [vmem:[#allocation10 + $0xe8] sm:$0xf]
    %v896 = vld [vmem:[#allocation10 + $0xec] sm:$0xf]
    %v897 = vld [vmem:[#allocation10 + $0xf0] sm:$0xf]
    %v898 = vld [vmem:[#allocation10 + $0xf4] sm:$0xf]
    %v899 = vld [vmem:[#allocation10 + $0xf8] sm:$0xf]
    %v900 = vld [vmem:[#allocation10 + $0xfc] sm:$0xf]
    %v901 = vld [vmem:[#allocation10 + $0x100] sm:$0xf]
    %v902 = vld [vmem:[#allocation10 + $0x104] sm:$0xf]
    %v903 = vld [vmem:[#allocation10 + $0x108] sm:$0xf]
    %v904 = vld [vmem:[#allocation10 + $0x10c] sm:$0xf]
    %v905 = vld [vmem:[#allocation10 + $0x110] sm:$0xf]
    %v906 = vld [vmem:[#allocation10 + $0x114] sm:$0xf]
    %v907 = vld [vmem:[#allocation10 + $0x118] sm:$0xf]
    %v908 = vld [vmem:[#allocation10 + $0x11c] sm:$0xf]
    %v909 = vld [vmem:[#allocation10 + $0x120] sm:$0xf]
    %v910 = vld [vmem:[#allocation10 + $0x124] sm:$0xf]
    %v911 = vld [vmem:[#allocation10 + $0x128] sm:$0xf]
    %v912 = vld [vmem:[#allocation10 + $0x12c] sm:$0xf]
    %v913 = vld [vmem:[#allocation10 + $0x130] sm:$0xf]
    %v914 = vld [vmem:[#allocation10 + $0x134] sm:$0xf]
    %v915 = vld [vmem:[#allocation10 + $0x138] sm:$0xf]
    %v916 = vld [vmem:[#allocation10 + $0x13c] sm:$0xf]
    %v917 = vld [vmem:[#allocation10 + $0x140] sm:$0xf]
    %v918 = vld [vmem:[#allocation10 + $0x144] sm:$0xf]
    %v919 = vld [vmem:[#allocation10 + $0x148] sm:$0xf]
    %v920 = vld [vmem:[#allocation10 + $0x14c] sm:$0xf]
    %v921 = vld [vmem:[#allocation10 + $0x150] sm:$0xf]
    %v922 = vld [vmem:[#allocation10 + $0x154] sm:$0xf]
    %v923 = vld [vmem:[#allocation10 + $0x158] sm:$0xf]
    %v924 = vld [vmem:[#allocation10 + $0x15c] sm:$0xf]
    %v925 = vld [vmem:[#allocation10 + $0x160] sm:$0xf]
    %v926 = vld [vmem:[#allocation10 + $0x164] sm:$0xf]
    %v927 = vld [vmem:[#allocation10 + $0x168] sm:$0xf]
    %v928 = vld [vmem:[#allocation10 + $0x16c] sm:$0xf]
    %v929 = vld [vmem:[#allocation10 + $0x170] sm:$0xf]
    %v930 = vld [vmem:[#allocation10 + $0x174] sm:$0xf]
    %v931 = vld [vmem:[#allocation10 + $0x178] sm:$0xf]
    %v932 = vld [vmem:[#allocation10 + $0x17c] sm:$0xf]
    %v933 = vld [vmem:[%s5] sm:$0x1]
    %v935 = vlaneseq
    %v936 = vshrl.u32 %v935, 7
    %v937 = vsub.s32 0, %v936
    %v938 = vrot.slane %v933, %v937
    %v943 = vunpack.c.l.b16 %v113
    %v944 = vunpack.c.h.b16 %v113
    %v945 = vunpack.c.l.b16 %v114
    %v946 = vunpack.c.h.b16 %v114
    %v947 = vunpack.c.l.b16 %v115
    %v948 = vunpack.c.h.b16 %v115
    %v949 = vpack.c.b16 %v943, %v943
    %v950 = vpack.c.b16 %v944, %v944
    %v951 = vpack.c.b16 %v945, %v945
    %v952 = vpack.c.b16 %v946, %v946
    %v953 = vpack.c.b16 %v947, %v947
    %v954 = vpack.c.b16 %v948, %v948
    %v1057 = vunpack.c.l.b16 %v837
    %v1058 = vunpack.c.l.b16 %v838
    %v1059 = vunpack.c.l.b16 %v839
    %v1060 = vunpack.c.l.b16 %v840
    %v1061 = vunpack.c.l.b16 %v841
    %v1062 = vunpack.c.l.b16 %v842
    %v1063 = vunpack.c.l.b16 %v843
    %v1064 = vunpack.c.l.b16 %v844
    %v1065 = vunpack.c.l.b16 %v845
    %v1066 = vunpack.c.l.b16 %v846
    %v1067 = vunpack.c.l.b16 %v847
    %v1068 = vunpack.c.l.b16 %v848
    %v1069 = vunpack.c.l.b16 %v849
    %v1070 = vunpack.c.l.b16 %v850
    %v1071 = vunpack.c.l.b16 %v851
    %v1072 = vunpack.c.l.b16 %v852
    %v1073 = vunpack.c.l.b16 %v853
    %v1074 = vunpack.c.l.b16 %v854
    %v1075 = vunpack.c.l.b16 %v855
    %v1076 = vunpack.c.l.b16 %v856
    %v1077 = vunpack.c.l.b16 %v857
    %v1078 = vunpack.c.l.b16 %v858
    %v1079 = vunpack.c.l.b16 %v859
    %v1080 = vunpack.c.l.b16 %v860
    %v1081 = vunpack.c.l.b16 %v861
    %v1082 = vunpack.c.l.b16 %v862
    %v1083 = vunpack.c.l.b16 %v863
    %v1084 = vunpack.c.l.b16 %v864
    %v1085 = vunpack.c.l.b16 %v865
    %v1086 = vunpack.c.l.b16 %v866
    %v1087 = vunpack.c.l.b16 %v867
    %v1088 = vunpack.c.l.b16 %v868
    %v1089 = vunpack.c.l.b16 %v869
    %v1090 = vunpack.c.l.b16 %v870
    %v1091 = vunpack.c.l.b16 %v871
    %v1092 = vunpack.c.l.b16 %v872
    %v1093 = vunpack.c.l.b16 %v873
    %v1094 = vunpack.c.l.b16 %v874
    %v1095 = vunpack.c.l.b16 %v875
    %v1096 = vunpack.c.l.b16 %v876
    %v1097 = vunpack.c.l.b16 %v877
    %v1098 = vunpack.c.l.b16 %v878
    %v1099 = vunpack.c.l.b16 %v879
    %v1100 = vunpack.c.l.b16 %v880
    %v1101 = vunpack.c.l.b16 %v881
    %v1102 = vunpack.c.l.b16 %v882
    %v1103 = vunpack.c.l.b16 %v883
    %v1104 = vunpack.c.l.b16 %v884
    %v1105 = vunpack.c.l.b16 %v885
    %v1106 = vunpack.c.l.b16 %v886
    %v1107 = vunpack.c.l.b16 %v887
    %v1108 = vunpack.c.l.b16 %v888
    %v1109 = vunpack.c.l.b16 %v889
    %v1110 = vunpack.c.l.b16 %v890
    %v1111 = vunpack.c.l.b16 %v891
    %v1112 = vunpack.c.l.b16 %v892
    %v1113 = vunpack.c.l.b16 %v893
    %v1114 = vunpack.c.l.b16 %v894
    %v1115 = vunpack.c.l.b16 %v895
    %v1116 = vunpack.c.l.b16 %v896
    %v1117 = vunpack.c.l.b16 %v897
    %v1118 = vunpack.c.l.b16 %v898
    %v1119 = vunpack.c.l.b16 %v899
    %v1120 = vunpack.c.l.b16 %v900
    %v1121 = vunpack.c.l.b16 %v901
    %v1122 = vunpack.c.l.b16 %v902
    %v1123 = vunpack.c.l.b16 %v903
    %v1124 = vunpack.c.l.b16 %v904
    %v1125 = vunpack.c.l.b16 %v905
    %v1126 = vunpack.c.l.b16 %v906
    %v1127 = vunpack.c.l.b16 %v907
    %v1128 = vunpack.c.l.b16 %v908
    %v1129 = vunpack.c.l.b16 %v909
    %v1130 = vunpack.c.l.b16 %v910
    %v1131 = vunpack.c.l.b16 %v911
    %v1132 = vunpack.c.l.b16 %v912
    %v1133 = vunpack.c.l.b16 %v913
    %v1134 = vunpack.c.l.b16 %v914
    %v1135 = vunpack.c.l.b16 %v915
    %v1136 = vunpack.c.l.b16 %v916
    %v1137 = vunpack.c.l.b16 %v917
    %v1138 = vunpack.c.l.b16 %v918
    %v1139 = vunpack.c.l.b16 %v919
    %v1140 = vunpack.c.l.b16 %v920
    %v1141 = vunpack.c.l.b16 %v921
    %v1142 = vunpack.c.l.b16 %v922
    %v1143 = vunpack.c.l.b16 %v923
    %v1144 = vunpack.c.l.b16 %v924
    %v1145 = vunpack.c.l.b16 %v925
    %v1146 = vunpack.c.l.b16 %v926
    %v1147 = vunpack.c.l.b16 %v927
    %v1148 = vunpack.c.l.b16 %v928
    %v1149 = vunpack.c.l.b16 %v929
    %v1150 = vunpack.c.l.b16 %v930
    %v1151 = vunpack.c.l.b16 %v931
    %v1152 = vunpack.c.l.b16 %v932
    %v1153 = vpack.c.b16 %v1058, %v1057
    %v1154 = vpack.c.b16 %v1060, %v1059
    %v1155 = vpack.c.b16 %v1062, %v1061
    %v1156 = vpack.c.b16 %v1064, %v1063
    %v1157 = vpack.c.b16 %v1066, %v1065
    %v1158 = vpack.c.b16 %v1068, %v1067
    %v1159 = vpack.c.b16 %v1070, %v1069
    %v1160 = vpack.c.b16 %v1072, %v1071
    %v1161 = vpack.c.b16 %v1074, %v1073
    %v1162 = vpack.c.b16 %v1076, %v1075
    %v1163 = vpack.c.b16 %v1078, %v1077
    %v1164 = vpack.c.b16 %v1080, %v1079
    %v1165 = vpack.c.b16 %v1082, %v1081
    %v1166 = vpack.c.b16 %v1084, %v1083
    %v1167 = vpack.c.b16 %v1086, %v1085
    %v1168 = vpack.c.b16 %v1088, %v1087
    %v1169 = vpack.c.b16 %v1090, %v1089
    %v1170 = vpack.c.b16 %v1092, %v1091
    %v1171 = vpack.c.b16 %v1094, %v1093
    %v1172 = vpack.c.b16 %v1096, %v1095
    %v1173 = vpack.c.b16 %v1098, %v1097
    %v1174 = vpack.c.b16 %v1100, %v1099
    %v1175 = vpack.c.b16 %v1102, %v1101
    %v1176 = vpack.c.b16 %v1104, %v1103
    %v1177 = vpack.c.b16 %v1106, %v1105
    %v1178 = vpack.c.b16 %v1108, %v1107
    %v1179 = vpack.c.b16 %v1110, %v1109
    %v1180 = vpack.c.b16 %v1112, %v1111
    %v1181 = vpack.c.b16 %v1114, %v1113
    %v1182 = vpack.c.b16 %v1116, %v1115
    %v1183 = vpack.c.b16 %v1118, %v1117
    %v1184 = vpack.c.b16 %v1120, %v1119
    %v1185 = vpack.c.b16 %v1122, %v1121
    %v1186 = vpack.c.b16 %v1124, %v1123
    %v1187 = vpack.c.b16 %v1126, %v1125
    %v1188 = vpack.c.b16 %v1128, %v1127
    %v1189 = vpack.c.b16 %v1130, %v1129
    %v1190 = vpack.c.b16 %v1132, %v1131
    %v1191 = vpack.c.b16 %v1134, %v1133
    %v1192 = vpack.c.b16 %v1136, %v1135
    %v1193 = vpack.c.b16 %v1138, %v1137
    %v1194 = vpack.c.b16 %v1140, %v1139
    %v1195 = vpack.c.b16 %v1142, %v1141
    %v1196 = vpack.c.b16 %v1144, %v1143
    %v1197 = vpack.c.b16 %v1146, %v1145
    %v1198 = vpack.c.b16 %v1148, %v1147
    %v1199 = vpack.c.b16 %v1150, %v1149
    %v1200 = vpack.c.b16 %v1152, %v1151
    %1249 = vmatprep.subr.bf16.mxu0 0
    %1250 = vmatpush1.bf16.msra.mxu0 %v1153
    %1251 = vmatprep.subr.bf16.mxu0 0
    %1252 = vmatpush1.bf16.msra.mxu0 %v1154
    %1253 = vmatprep.subr.bf16.mxu0 0
    %1254 = vmatpush1.bf16.msra.mxu0 %v1155
    %1255 = vmatprep.subr.bf16.mxu0 0
    %1256 = vmatpush1.bf16.msra.mxu0 %v1156
    %1257 = vmatprep.subr.bf16.mxu0 0
    %1258 = vmatpush1.bf16.msra.mxu0 %v1157
    %1259 = vmatprep.subr.bf16.mxu0 0
    %1260 = vmatpush1.bf16.msra.mxu0 %v1158
    %1261 = vmatprep.subr.bf16.mxu0 0
    %1262 = vmatpush1.bf16.msra.mxu0 %v1159
    %1263 = vmatprep.subr.bf16.mxu0 0
    %1264 = vmatpush1.bf16.msra.mxu0 %v1160
    %1265 = vmatprep.subr.bf16.mxu0 0
    %1266 = vmatpush1.bf16.msra.mxu0 %v1161
    %1267 = vmatprep.subr.bf16.mxu0 0
    %1268 = vmatpush1.bf16.msra.mxu0 %v1162
    %1269 = vmatprep.subr.bf16.mxu0 0
    %1270 = vmatpush1.bf16.msra.mxu0 %v1163
    %1271 = vmatprep.subr.bf16.mxu0 0
    %1272 = vmatpush1.bf16.msra.mxu0 %v1164
    %1273 = vmatprep.subr.bf16.mxu0 0
    %1274 = vmatpush1.bf16.msra.mxu0 %v1165
    %1275 = vmatprep.subr.bf16.mxu0 0
    %1276 = vmatpush1.bf16.msra.mxu0 %v1166
    %1277 = vmatprep.subr.bf16.mxu0 0
    %1278 = vmatpush1.bf16.msra.mxu0 %v1167
    %1279 = vmatprep.subr.bf16.mxu0 0
    %1280 = vmatpush1.bf16.msra.mxu0 %v1168
    %1281 = vmatprep.mubr.bf16.mxu0 %v950
    %1282 = vmatmul.mubr.bf16.gmra.mrb[0].mxu0 %v949
    %v1283 = vpop.f32.mrb[0].mxu0
    %v1284 = vadd.f32 %v938, %v1283
    %v1285 = vpop.f32.mrb[0].mxu0
    %v1286 = vpop.f32.mrb[0].mxu0
    %v1287 = vpop.f32.mrb[0].mxu0
    %1288 = vdwg.mxu0
    %1289 = vmatprep.subr.bf16.mxu0 0
    %1290 = vmatpush1.bf16.msra.mxu0 %v1169
    %1291 = vmatprep.subr.bf16.mxu0 0
    %1292 = vmatpush1.bf16.msra.mxu0 %v1170
    %1293 = vmatprep.subr.bf16.mxu0 0
    %1294 = vmatpush1.bf16.msra.mxu0 %v1171
    %1295 = vmatprep.subr.bf16.mxu0 0
    %1296 = vmatpush1.bf16.msra.mxu0 %v1172
    %1297 = vmatprep.subr.bf16.mxu0 0
    %1298 = vmatpush1.bf16.msra.mxu0 %v1173
    %1299 = vmatprep.subr.bf16.mxu0 0
    %1300 = vmatpush1.bf16.msra.mxu0 %v1174
    %1301 = vmatprep.subr.bf16.mxu0 0
    %1302 = vmatpush1.bf16.msra.mxu0 %v1175
    %1303 = vmatprep.subr.bf16.mxu0 0
    %1304 = vmatpush1.bf16.msra.mxu0 %v1176
    %1305 = vmatprep.subr.bf16.mxu0 0
    %1306 = vmatpush1.bf16.msra.mxu0 %v1177
    %1307 = vmatprep.subr.bf16.mxu0 0
    %1308 = vmatpush1.bf16.msra.mxu0 %v1178
    %1309 = vmatprep.subr.bf16.mxu0 0
    %1310 = vmatpush1.bf16.msra.mxu0 %v1179
    %1311 = vmatprep.subr.bf16.mxu0 0
    %1312 = vmatpush1.bf16.msra.mxu0 %v1180
    %1313 = vmatprep.subr.bf16.mxu0 0
    %1314 = vmatpush1.bf16.msra.mxu0 %v1181
    %1315 = vmatprep.subr.bf16.mxu0 0
    %1316 = vmatpush1.bf16.msra.mxu0 %v1182
    %1317 = vmatprep.subr.bf16.mxu0 0
    %1318 = vmatpush1.bf16.msra.mxu0 %v1183
    %1319 = vmatprep.subr.bf16.mxu0 0
    %1320 = vmatpush1.bf16.msra.mxu0 %v1184
    %1321 = vmatprep.mubr.bf16.mxu0 %v952
    %1322 = vmatmul.mubr.bf16.gmra.mrb[0].mxu0 %v951
    %v1323 = vpop.f32.mrb[0].mxu0
    %v1324 = vadd.f32 %v1284, %v1323
    %v1325 = vpop.f32.mrb[0].mxu0
    %v1326 = vpop.f32.mrb[0].mxu0
    %v1327 = vpop.f32.mrb[0].mxu0
    %1328 = vdwg.mxu0
    %1329 = vmatprep.subr.bf16.mxu0 0
    %1330 = vmatpush1.bf16.msra.mxu0 %v1185
    %1331 = vmatprep.subr.bf16.mxu0 0
    %1332 = vmatpush1.bf16.msra.mxu0 %v1186
    %1333 = vmatprep.subr.bf16.mxu0 0
    %1334 = vmatpush1.bf16.msra.mxu0 %v1187
    %1335 = vmatprep.subr.bf16.mxu0 0
    %1336 = vmatpush1.bf16.msra.mxu0 %v1188
    %1337 = vmatprep.subr.bf16.mxu0 0
    %1338 = vmatpush1.bf16.msra.mxu0 %v1189
    %1339 = vmatprep.subr.bf16.mxu0 0
    %1340 = vmatpush1.bf16.msra.mxu0 %v1190
    %1341 = vmatprep.subr.bf16.mxu0 0
    %1342 = vmatpush1.bf16.msra.mxu0 %v1191
    %1343 = vmatprep.subr.bf16.mxu0 0
    %1344 = vmatpush1.bf16.msra.mxu0 %v1192
    %1345 = vmatprep.subr.bf16.mxu0 0
    %1346 = vmatpush1.bf16.msra.mxu0 %v1193
    %1347 = vmatprep.subr.bf16.mxu0 0
    %1348 = vmatpush1.bf16.msra.mxu0 %v1194
    %1349 = vmatprep.subr.bf16.mxu0 0
    %1350 = vmatpush1.bf16.msra.mxu0 %v1195
    %1351 = vmatprep.subr.bf16.mxu0 0
    %1352 = vmatpush1.bf16.msra.mxu0 %v1196
    %1353 = vmatprep.subr.bf16.mxu0 0
    %1354 = vmatpush1.bf16.msra.mxu0 %v1197
    %1355 = vmatprep.subr.bf16.mxu0 0
    %1356 = vmatpush1.bf16.msra.mxu0 %v1198
    %1357 = vmatprep.subr.bf16.mxu0 0
    %1358 = vmatpush1.bf16.msra.mxu0 %v1199
    %1359 = vmatprep.subr.bf16.mxu0 0
    %1360 = vmatpush1.bf16.msra.mxu0 %v1200
    %1361 = vmatprep.mubr.bf16.mxu0 %v954
    %1362 = vmatmul.mubr.bf16.gmra.mrb[0].mxu0 %v953
    %v1363 = vpop.f32.mrb[0].mxu0
    %v1364 = vadd.f32 %v1324, %v1363
    %v1365 = vpop.f32.mrb[0].mxu0
    %v1366 = vpop.f32.mrb[0].mxu0
    %v1367 = vpop.f32.mrb[0].mxu0
    %1368 = vdwg.mxu0
    %v1369 = vmax.f32 %v1364, 0.0
    %v1370 = vld [vmem:[%s7] sm:$0x1]
    %v1372 = vlaneseq
    %v1373 = vshrl.u32 %v1372, 7
    %v1374 = vsub.s32 0, %v1373
    %v1375 = vrot.slane %v1370, %v1374
    %v1377 = vmul.f32 %v1369, %v1375
    %1378 = vadd.xlane.f32.xlu0 %v1377
    %v1379 = vpop.xlane.xlu0 %1378
    %s1380 = sld [smem:[#allocation3]]
    %v1381 = vstv %s1380
    %v1382 = vadd.f32 %v1379, %v1381
    %v1383 = vmul.f32 %v836, %v823
    %v1384 = vmul.f32 %v1382, %v1369
    %v1385 = vadd.f32 %v1383, %v1384
    %v1386 = vld [vmem:[#allocation12] sm:$0xff]
    %v1387 = vld [vmem:[#allocation12 + $0x8] sm:$0xff]
    %v1388 = vld [vmem:[#allocation12 + $0x10] sm:$0xff]
    %v1389 = vld [vmem:[#allocation12 + $0x18] sm:$0xff]
    %v1390 = vld [vmem:[#allocation12 + $0x20] sm:$0xff]
    %v1391 = vld [vmem:[#allocation12 + $0x28] sm:$0xff]
    %v1392 = vld [vmem:[#allocation12 + $0x30] sm:$0xff]
    %v1393 = vld [vmem:[#allocation12 + $0x38] sm:$0xff]
    %v1394 = vld [vmem:[#allocation12 + $0x40] sm:$0xff]
    %v1395 = vld [vmem:[#allocation12 + $0x48] sm:$0xff]
    %v1396 = vld [vmem:[#allocation12 + $0x50] sm:$0xff]
    %v1397 = vld [vmem:[#allocation12 + $0x58] sm:$0xff]
    %v1398 = vld [vmem:[#allocation12 + $0x60] sm:$0xff]
    %v1399 = vld [vmem:[#allocation12 + $0x68] sm:$0xff]
    %v1400 = vld [vmem:[#allocation12 + $0x70] sm:$0xff]
    %v1401 = vld [vmem:[#allocation12 + $0x78] sm:$0xff]
    %v1402 = vld [vmem:[%s9] sm:$0x1]
    %v1404 = vlaneseq
    %v1405 = vshrl.u32 %v1404, 7
    %v1406 = vsub.s32 0, %v1405
    %v1407 = vrot.slane %v1402, %v1406
    %1409 = vmatprep.subr.mxu0 0.0
    %1410 = vmatpush1.msra.mxu0 %v1386
    %1411 = vmatprep.subr.mxu0 0.0
    %1412 = vmatpush1.msra.mxu0 %v1387
    %1413 = vmatprep.subr.mxu0 0.0
    %1414 = vmatpush1.msra.mxu0 %v1388
    %1415 = vmatprep.subr.mxu0 0.0
    %1416 = vmatpush1.msra.mxu0 %v1389
    %1417 = vmatprep.subr.mxu0 0.0
    %1418 = vmatpush1.msra.mxu0 %v1390
    %1419 = vmatprep.subr.mxu0 0.0
    %1420 = vmatpush1.msra.mxu0 %v1391
    %1421 = vmatprep.subr.mxu0 0.0
    %1422 = vmatpush1.msra.mxu0 %v1392
    %1423 = vmatprep.subr.mxu0 0.0
    %1424 = vmatpush1.msra.mxu0 %v1393
    %1425 = vmatprep.subr.mxu0 0.0
    %1426 = vmatpush1.msra.mxu0 %v1394
    %1427 = vmatprep.subr.mxu0 0.0
    %1428 = vmatpush1.msra.mxu0 %v1395
    %1429 = vmatprep.subr.mxu0 0.0
    %1430 = vmatpush1.msra.mxu0 %v1396
    %1431 = vmatprep.subr.mxu0 0.0
    %1432 = vmatpush1.msra.mxu0 %v1397
    %1433 = vmatprep.subr.mxu0 0.0
    %1434 = vmatpush1.msra.mxu0 %v1398
    %1435 = vmatprep.subr.mxu0 0.0
    %1436 = vmatpush1.msra.mxu0 %v1399
    %1437 = vmatprep.subr.mxu0 0.0
    %1438 = vmatpush1.msra.mxu0 %v1400
    %1439 = vmatprep.subr.mxu0 0.0
    %1440 = vmatpush1.msra.mxu0 %v1401
    %1441 = vmatprep.subr.mxu0 0.0
    %1442 = vmatpush1.msra.mxu0 0.0
    %1443 = vmatprep.subr.mxu0 0.0
    %1444 = vmatpush1.msra.mxu0 0.0
    %1445 = vmatprep.subr.mxu0 0.0
    %1446 = vmatpush1.msra.mxu0 0.0
    %1447 = vmatprep.subr.mxu0 0.0
    %1448 = vmatpush1.msra.mxu0 0.0
    %1449 = vmatprep.subr.mxu0 0.0
    %1450 = vmatpush1.msra.mxu0 0.0
    %1451 = vmatprep.subr.mxu0 0.0
    %1452 = vmatpush1.msra.mxu0 0.0
    %1453 = vmatprep.subr.mxu0 0.0
    %1454 = vmatpush1.msra.mxu0 0.0
    %1455 = vmatprep.subr.mxu0 0.0
    %1456 = vmatpush1.msra.mxu0 0.0
    %1457 = vmatprep.subr.mxu0 0.0
    %1458 = vmatpush1.msra.mxu0 0.0
    %1459 = vmatprep.subr.mxu0 0.0
    %1460 = vmatpush1.msra.mxu0 0.0
    %1461 = vmatprep.subr.mxu0 0.0
    %1462 = vmatpush1.msra.mxu0 0.0
    %1463 = vmatprep.subr.mxu0 0.0
    %1464 = vmatpush1.msra.mxu0 0.0
    %1465 = vmatprep.subr.mxu0 0.0
    %1466 = vmatpush1.msra.mxu0 0.0
    %1467 = vmatprep.subr.mxu0 0.0
    %1468 = vmatpush1.msra.mxu0 0.0
    %1469 = vmatprep.subr.mxu0 0.0
    %1470 = vmatpush1.msra.mxu0 0.0
    %1471 = vmatprep.subr.mxu0 0.0
    %1472 = vmatpush1.msra.mxu0 0.0
    %1473 = vmatprep.mubr.f32.mxu0 0.0
    %1474 = vmatmul.mubr.f32.gmra.mrb[0].mxu0 %v1385
    %v1475 = vpop.f32.mrb[0].mxu0
    %v1476 = vadd.f32 %v1407, %v1475
    %v1477 = vpop.f32.mrb[0].mxu0
    %1478 = vdwg.mxu0
    %1479 = vst [vmem:[#allocation13] sm:$0xff] %v1476
    // Predicated region
    $region70: #{tpu_custom_call.1} parent=1 // pred_check
      _
    $region71: #{tpu_custom_call.1} parent=1 // pred_check_branch
      %1481 = sbr.rel (0) target = $region73
    $region72: #{tpu_custom_call.1} parent=1 // pred_region
      %s1483 = ssub.s32 128, 128
      %1484 = vsyncadd [#allocation6], %s1483
      %s1486 = sshll.u32 [#allocation13], 4
      %s1487 = int_to_ptr.vmem [resolvable:$true] %s1486
      %1489 = dma.vmem_to_hbm [thread:$0]  %s1487, 128, %s12, [#allocation6]
    $region73: #{tpu_custom_call.1} parent=1 // pred_fallthru
      _
    // Predicated region
    $region74: #{tpu_custom_call.1} parent=1 // pred_check
      _
    $region75: #{tpu_custom_call.1} parent=1 // pred_check_branch
      %1491 = sbr.rel (0) target = $region77
    $region76: #{tpu_custom_call.1} parent=1 // pred_region
      %1492 = dma.done [#allocation6], 128
    $region77: #{tpu_custom_call.1} parent=1 // pred_fallthru
      _
    %1493 = vsyncpa [#allocation5], 1
    %1494 = vsyncpa [#allocation8], 1
    %1495 = vsyncpa [#allocation11], 1
    %1496 = vsyncpa [#allocation6], 1

</llo_original>
